<compile_context>
chip_gen: v6e
topology: v6e:2x2x1
jax: 0.10.0
libtpu: 0.0.40
codegen_flags: <defaults>
</compile_context>

<pallas_src>
import jax
import jax.numpy as jnp
from jax.experimental import pallas as pl
from jax.experimental.pallas import tpu as pltpu

# ---- small, module-consistent config -----------------------------------
B = 2          # batch
M = 8          # sequence length (frames)
F = 32         # feature_size
E = 2          # expansion_size
G = 4          # num_groups
C = 8          # cluster_size
O = 16         # output_size
EF = E * F     # expanded feature size           (E * F)
NF = EF // G   # new_feature_size                (E * F / G)
GC = G * C     # groups * clusters


# ---- Pallas kernel -------------------------------------------------------
def nextvlad_kernel(x_ref, exp_w_ref, exp_b_ref, comb_w_ref, attn_b_ref,
                    cw_ref, fcw_ref, fc_b_ref, out_ref):
    # ---- batch-fused feature expansion:  [B*M, F] @ [F, EF] --------------
    x = x_ref[...]                                               # [B*M, F]
    expanded = (jnp.dot(x, exp_w_ref[...],
                        preferred_element_type=jnp.float32)
                + exp_b_ref[...])                                # [B*M, EF]

    # ---- one matmul for cluster logits + attention pre-activations -------
    comb = jnp.dot(expanded, comb_w_ref[...],
                   preferred_element_type=jnp.float32)           # [B*M, GC+G]
    attn = jax.nn.sigmoid(comb[:, GC:] + attn_b_ref[...])        # [B*M, G]

    # ---- per-group softmax * group attention (static lane slices) --------
    acts = []
    for g in range(G):
        logits = comb[:, g * C:(g + 1) * C]                      # [B*M, C]
        m_ = jnp.max(logits, axis=-1, keepdims=True)
        e_ = jnp.exp(logits - m_)
        denom = jnp.sum(e_, axis=-1, keepdims=True)
        p = e_ * pl.reciprocal(denom, approx=True)               # EUP slot
        acts.append(p * attn[:, g:g + 1])                        # [B*M, C]
    act_all = jnp.concatenate(acts, axis=1)                      # [B*M, GC]

    # ---- per-batch VLAD aggregation, L2 norm, final FC --------------------
    out_rows = []
    for b in range(B):
        r0, r1 = b * M, (b + 1) * M
        act_b = act_all[r0:r1, :]                                # [M, GC]
        x_b = expanded[r0:r1, :]                                 # [M, EF]

        # One matmul gives every (feature, cluster) pair contracted over M;
        # VLAD only needs the group-diagonal [NF, C] blocks, summed over g.
        big = jax.lax.dot_general(x_b, act_b, (((0,), (0,)), ((), ())),
                                  preferred_element_type=jnp.float32)  # [EF, GC]
        vlad = big[0:NF, 0:C]
        for g in range(1, G):
            vlad = vlad + big[g * NF:(g + 1) * NF, g * C:(g + 1) * C]  # [NF, C]

        # a_sum over frames and groups, then a = a_sum * cluster_weight
        col_sum = jnp.sum(act_b, axis=0, keepdims=True)          # [1, GC]
        a_sum = col_sum[:, 0:C]
        for g in range(1, G):
            a_sum = a_sum + col_sum[:, g * C:(g + 1) * C]        # [1, C]

        v = vlad - a_sum * cw_ref[...]                           # [NF, C]
        sq = jnp.sum(v * v, axis=0, keepdims=True)               # [1, C]
        v = v * jax.lax.rsqrt(jnp.maximum(sq, 1e-24))            # == v / max(||v||, 1e-12)

        # Final FC: contract K = NF once on the MXU against the [NF, C*O]
        # re-grouped weight, then finish the C-contraction with static
        # lane-slice adds (flatten order n*C + c is preserved).
        y = jax.lax.dot_general(v, fcw_ref[...], (((0,), (0,)), ((), ())),
                                preferred_element_type=jnp.float32)    # [C, C*O]
        o_b = fc_b_ref[...]                                      # [1, O]
        for c in range(C):
            o_b = o_b + y[c:c + 1, c * O:(c + 1) * O]
        out_rows.append(o_b)

    out_ref[...] = jnp.concatenate(out_rows, axis=0)             # [B, O]


# ---- wrapper: layout plumbing in plain JAX, one pallas_call ---------------
def nextvlad_forward(x, params):
    exp_w, exp_b, attn_w, attn_b, clus_w, cw, fc_w, fc_b = params
    # cluster + attention weights fused into one [EF, GC+G] matrix
    comb_w = jnp.concatenate([clus_w, attn_w], axis=1)           # [EF, GC+G]
    # fc weight [NF*C, O] -> [NF, C*O] so in-kernel contraction is K=NF
    fcw = fc_w.reshape(NF, C, O).reshape(NF, C * O)              # [NF, C*O]
    x2 = x.reshape(B * M, F)                                     # fold batch outside

    return pl.pallas_call(
        nextvlad_kernel,
        out_shape=jax.ShapeDtypeStruct((B, O), jnp.float32),
        grid_spec=pltpu.PrefetchScalarGridSpec(
            num_scalar_prefetch=0,
            grid=(1,),
            in_specs=[
                pl.BlockSpec((B * M, F), lambda i: (0, 0)),      # x (batch-folded)
                pl.BlockSpec((F, EF), lambda i: (0, 0)),         # expansion W
                pl.BlockSpec((1, EF), lambda i: (0, 0)),         # expansion b
                pl.BlockSpec((EF, GC + G), lambda i: (0, 0)),    # cluster+attn W
                pl.BlockSpec((1, G), lambda i: (0, 0)),          # attention b
                pl.BlockSpec((NF, C), lambda i: (0, 0)),         # cluster_weight
                pl.BlockSpec((NF, C * O), lambda i: (0, 0)),     # fc W (regrouped)
                pl.BlockSpec((1, O), lambda i: (0, 0)),          # fc b
            ],
            out_specs=pl.BlockSpec((B, O), lambda i: (0, 0)),
        ),
        compiler_params=pltpu.CompilerParams(
            dimension_semantics=("arbitrary",)),
    )(x2, exp_w, exp_b, comb_w, attn_b, cw, fcw, fc_b)


# ---- pure-JAX reference (mirrors the torch forward) ----------------------
def nextvlad_ref(x, params):
    exp_w, exp_b, attn_w, attn_b, clus_w, cw, fc_w, fc_b = params
    inputs = x @ exp_w + exp_b                                # [B, M, EF]
    attention = jax.nn.sigmoid(inputs @ attn_w + attn_b)      # [B, M, G]
    attention = attention.reshape(B, M * G, 1)
    reshaped = inputs.reshape(B * M, EF)
    activation = (reshaped @ clus_w).reshape(B, M * G, C)
    activation = jax.nn.softmax(activation, axis=-1) * attention
    a_sum = activation.sum(axis=-2, keepdims=True)            # [B, 1, C]
    a = a_sum * cw[None]                                      # [B, NF, C]
    act_t = jnp.transpose(activation, (0, 2, 1))              # [B, C, M*G]
    resh2 = inputs.reshape(B, M * G, NF)
    vlad = jnp.matmul(act_t, resh2)                           # [B, C, NF]
    vlad = jnp.transpose(vlad, (0, 2, 1))                     # [B, NF, C]
    v = vlad - a
    norm = jnp.sqrt(jnp.sum(v * v, axis=1, keepdims=True))
    v = v / jnp.maximum(norm, 1e-12)
    v = v.reshape(B, NF * C)
    return v @ fc_w + fc_b


# ---- deterministic parameter init + run ----------------------------------
if __name__ == "__main__":
    key = jax.random.PRNGKey(0)
    ks = jax.random.split(key, 9)

    exp_w = 0.05 * jax.random.normal(ks[0], (F, EF), jnp.float32)
    exp_b = 0.05 * jax.random.normal(ks[1], (1, EF), jnp.float32)
    attn_w = 0.05 * jax.random.normal(ks[2], (EF, G), jnp.float32)
    attn_b = 0.05 * jax.random.normal(ks[3], (1, G), jnp.float32)
    clus_w = 0.05 * jax.random.normal(ks[4], (EF, GC), jnp.float32)   # no bias
    # cluster_weight: torch param is [1, NF, C] -> use [NF, C]
    cw = 0.01 * jax.random.normal(ks[5], (NF, C), jnp.float32)
    fc_w = 0.05 * jax.random.normal(ks[6], (NF * C, O), jnp.float32)
    fc_b = 0.05 * jax.random.normal(ks[7], (1, O), jnp.float32)

    params = (exp_w, exp_b, attn_w, attn_b, clus_w, cw, fc_w, fc_b)

    x = jax.random.normal(ks[8], (B, M, F), jnp.float32)

    out = nextvlad_forward(x, params)
    out = jax.block_until_ready(out)

    ref = nextvlad_ref(x, params)
    assert out.shape == (B, O)
    assert jnp.allclose(out, ref, atol=1e-2, rtol=1e-2), \
        f"max abs diff {jnp.max(jnp.abs(out - ref))}"

    print("KERNEL_OK")
</pallas_src>

<mosaic_0001>
module attributes {stable_mosaic.version = 11 : i64} {
  func.func @nextvlad_kernel(%arg0: i32, %arg1: memref<16x32xf32, #tpu.memory_space<vmem>>, %arg2: memref<32x64xf32, #tpu.memory_space<vmem>>, %arg3: memref<1x64xf32, #tpu.memory_space<vmem>>, %arg4: memref<64x36xf32, #tpu.memory_space<vmem>>, %arg5: memref<1x4xf32, #tpu.memory_space<vmem>>, %arg6: memref<16x8xf32, #tpu.memory_space<vmem>>, %arg7: memref<16x128xf32, #tpu.memory_space<vmem>>, %arg8: memref<1x16xf32, #tpu.memory_space<vmem>>, %arg9: memref<2x16xf32, #tpu.memory_space<vmem>>) attributes {dimension_semantics = [#tpu.dimension_semantics<arbitrary>], iteration_bounds = array<i64: 1>, scalar_prefetch = 0 : i64, scratch_operands = 0 : i64, tpu.core_type = #tpu.core_type<tc>, window_params = [{pipeline_mode = #tpu.pipeline_mode<synchronous>, transform_indices = @transform_0, window_bounds = array<i64: 16, 32>}, {pipeline_mode = #tpu.pipeline_mode<synchronous>, transform_indices = @transform_1, window_bounds = array<i64: 32, 64>}, {pipeline_mode = #tpu.pipeline_mode<synchronous>, transform_indices = @transform_2, window_bounds = array<i64: 1, 64>}, {pipeline_mode = #tpu.pipeline_mode<synchronous>, transform_indices = @transform_3, window_bounds = array<i64: 64, 36>}, {pipeline_mode = #tpu.pipeline_mode<synchronous>, transform_indices = @transform_4, window_bounds = array<i64: 1, 4>}, {pipeline_mode = #tpu.pipeline_mode<synchronous>, transform_indices = @transform_5, window_bounds = array<i64: 16, 8>}, {pipeline_mode = #tpu.pipeline_mode<synchronous>, transform_indices = @transform_6, window_bounds = array<i64: 16, 128>}, {pipeline_mode = #tpu.pipeline_mode<synchronous>, transform_indices = @transform_7, window_bounds = array<i64: 1, 16>}, {pipeline_mode = #tpu.pipeline_mode<synchronous>, transform_indices = @transform_8, window_bounds = array<i64: 2, 16>}]} {
    %c0 = arith.constant 0 : index
    %c0_0 = arith.constant 0 : index
    %0 = vector.load %arg1[%c0, %c0_0] : memref<16x32xf32, #tpu.memory_space<vmem>>, vector<16x32xf32>
    %c0_1 = arith.constant 0 : index
    %c0_2 = arith.constant 0 : index
    %1 = vector.load %arg2[%c0_1, %c0_2] : memref<32x64xf32, #tpu.memory_space<vmem>>, vector<32x64xf32>
    %cst = arith.constant dense<0.000000e+00> : vector<16x64xf32>
    %2 = tpu.matmul %0, %1, %cst {dimension_numbers = #tpu.dot_dimension_numbers<[1], [0], [0], [1], [0, 0, 1, 1], [], []>} : vector<16x32xf32>, vector<32x64xf32>, vector<16x64xf32> -> vector<16x64xf32>
    %c0_3 = arith.constant 0 : index
    %c0_4 = arith.constant 0 : index
    %3 = vector.load %arg3[%c0_3, %c0_4] : memref<1x64xf32, #tpu.memory_space<vmem>>, vector<1x64xf32>
    %4 = vector.broadcast %3 : vector<1x64xf32> to vector<16x64xf32>
    %5 = arith.addf %2, %4 : vector<16x64xf32>
    %c0_5 = arith.constant 0 : index
    %c0_6 = arith.constant 0 : index
    %6 = vector.load %arg4[%c0_5, %c0_6] : memref<64x36xf32, #tpu.memory_space<vmem>>, vector<64x36xf32>
    %cst_7 = arith.constant dense<0.000000e+00> : vector<16x36xf32>
    %7 = tpu.matmul %5, %6, %cst_7 {dimension_numbers = #tpu.dot_dimension_numbers<[1], [0], [0], [1], [0, 0, 1, 1], [], []>} : vector<16x64xf32>, vector<64x36xf32>, vector<16x36xf32> -> vector<16x36xf32>
    %8 = vector.extract_strided_slice %7 {offsets = [0, 32], sizes = [16, 4], strides = [1, 1]} : vector<16x36xf32> to vector<16x4xf32>
    %c0_8 = arith.constant 0 : index
    %c0_9 = arith.constant 0 : index
    %9 = vector.load %arg5[%c0_8, %c0_9] : memref<1x4xf32, #tpu.memory_space<vmem>>, vector<1x4xf32>
    %10 = vector.broadcast %9 : vector<1x4xf32> to vector<16x4xf32>
    %11 = arith.addf %8, %10 : vector<16x4xf32>
    %12 = arith.negf %11 : vector<16x4xf32>
    %13 = math.exp %12 : vector<16x4xf32>
    %cst_10 = arith.constant 1.000000e+00 : f32
    %14 = vector.broadcast %cst_10 : f32 to vector<16x4xf32>
    %15 = arith.addf %14, %13 : vector<16x4xf32>
    %16 = arith.divf %14, %15 : vector<16x4xf32>
    %17 = vector.extract_strided_slice %7 {offsets = [0, 0], sizes = [16, 8], strides = [1, 1]} : vector<16x36xf32> to vector<16x8xf32>
    %cst_11 = arith.constant dense<0xFF800000> : vector<16xf32>
    %18 = vector.multi_reduction <maximumf>, %17, %cst_11 [1] : vector<16x8xf32> to vector<16xf32>
    %19 = vector.shape_cast %18 : vector<16xf32> to vector<16x1xf32>
    %20 = vector.broadcast %19 : vector<16x1xf32> to vector<16x8xf32>
    %21 = arith.subf %17, %20 : vector<16x8xf32>
    %22 = math.exp %21 : vector<16x8xf32>
    %cst_12 = arith.constant dense<0.000000e+00> : vector<16xf32>
    %23 = vector.multi_reduction <add>, %22, %cst_12 [1] : vector<16x8xf32> to vector<16xf32>
    %24 = vector.shape_cast %23 : vector<16xf32> to vector<16x1xf32>
    %25 = tpu.reciprocal %24 {approx = true} : vector<16x1xf32> -> vector<16x1xf32>
    %26 = vector.broadcast %25 : vector<16x1xf32> to vector<16x8xf32>
    %27 = arith.mulf %22, %26 : vector<16x8xf32>
    %28 = vector.extract_strided_slice %16 {offsets = [0, 0], sizes = [16, 1], strides = [1, 1]} : vector<16x4xf32> to vector<16x1xf32>
    %29 = vector.broadcast %28 : vector<16x1xf32> to vector<16x8xf32>
    %30 = arith.mulf %27, %29 : vector<16x8xf32>
    %31 = vector.extract_strided_slice %7 {offsets = [0, 8], sizes = [16, 8], strides = [1, 1]} : vector<16x36xf32> to vector<16x8xf32>
    %cst_13 = arith.constant dense<0xFF800000> : vector<16xf32>
    %32 = vector.multi_reduction <maximumf>, %31, %cst_13 [1] : vector<16x8xf32> to vector<16xf32>
    %33 = vector.shape_cast %32 : vector<16xf32> to vector<16x1xf32>
    %34 = vector.broadcast %33 : vector<16x1xf32> to vector<16x8xf32>
    %35 = arith.subf %31, %34 : vector<16x8xf32>
    %36 = math.exp %35 : vector<16x8xf32>
    %cst_14 = arith.constant dense<0.000000e+00> : vector<16xf32>
    %37 = vector.multi_reduction <add>, %36, %cst_14 [1] : vector<16x8xf32> to vector<16xf32>
    %38 = vector.shape_cast %37 : vector<16xf32> to vector<16x1xf32>
    %39 = tpu.reciprocal %38 {approx = true} : vector<16x1xf32> -> vector<16x1xf32>
    %40 = vector.broadcast %39 : vector<16x1xf32> to vector<16x8xf32>
    %41 = arith.mulf %36, %40 : vector<16x8xf32>
    %42 = vector.extract_strided_slice %16 {offsets = [0, 1], sizes = [16, 1], strides = [1, 1]} : vector<16x4xf32> to vector<16x1xf32>
    %43 = vector.broadcast %42 : vector<16x1xf32> to vector<16x8xf32>
    %44 = arith.mulf %41, %43 : vector<16x8xf32>
    %45 = vector.extract_strided_slice %7 {offsets = [0, 16], sizes = [16, 8], strides = [1, 1]} : vector<16x36xf32> to vector<16x8xf32>
    %cst_15 = arith.constant dense<0xFF800000> : vector<16xf32>
    %46 = vector.multi_reduction <maximumf>, %45, %cst_15 [1] : vector<16x8xf32> to vector<16xf32>
    %47 = vector.shape_cast %46 : vector<16xf32> to vector<16x1xf32>
    %48 = vector.broadcast %47 : vector<16x1xf32> to vector<16x8xf32>
    %49 = arith.subf %45, %48 : vector<16x8xf32>
    %50 = math.exp %49 : vector<16x8xf32>
    %cst_16 = arith.constant dense<0.000000e+00> : vector<16xf32>
    %51 = vector.multi_reduction <add>, %50, %cst_16 [1] : vector<16x8xf32> to vector<16xf32>
    %52 = vector.shape_cast %51 : vector<16xf32> to vector<16x1xf32>
    %53 = tpu.reciprocal %52 {approx = true} : vector<16x1xf32> -> vector<16x1xf32>
    %54 = vector.broadcast %53 : vector<16x1xf32> to vector<16x8xf32>
    %55 = arith.mulf %50, %54 : vector<16x8xf32>
    %56 = vector.extract_strided_slice %16 {offsets = [0, 2], sizes = [16, 1], strides = [1, 1]} : vector<16x4xf32> to vector<16x1xf32>
    %57 = vector.broadcast %56 : vector<16x1xf32> to vector<16x8xf32>
    %58 = arith.mulf %55, %57 : vector<16x8xf32>
    %59 = vector.extract_strided_slice %7 {offsets = [0, 24], sizes = [16, 8], strides = [1, 1]} : vector<16x36xf32> to vector<16x8xf32>
    %cst_17 = arith.constant dense<0xFF800000> : vector<16xf32>
    %60 = vector.multi_reduction <maximumf>, %59, %cst_17 [1] : vector<16x8xf32> to vector<16xf32>
    %61 = vector.shape_cast %60 : vector<16xf32> to vector<16x1xf32>
    %62 = vector.broadcast %61 : vector<16x1xf32> to vector<16x8xf32>
    %63 = arith.subf %59, %62 : vector<16x8xf32>
    %64 = math.exp %63 : vector<16x8xf32>
    %cst_18 = arith.constant dense<0.000000e+00> : vector<16xf32>
    %65 = vector.multi_reduction <add>, %64, %cst_18 [1] : vector<16x8xf32> to vector<16xf32>
    %66 = vector.shape_cast %65 : vector<16xf32> to vector<16x1xf32>
    %67 = tpu.reciprocal %66 {approx = true} : vector<16x1xf32> -> vector<16x1xf32>
    %68 = vector.broadcast %67 : vector<16x1xf32> to vector<16x8xf32>
    %69 = arith.mulf %64, %68 : vector<16x8xf32>
    %70 = vector.extract_strided_slice %16 {offsets = [0, 3], sizes = [16, 1], strides = [1, 1]} : vector<16x4xf32> to vector<16x1xf32>
    %71 = vector.broadcast %70 : vector<16x1xf32> to vector<16x8xf32>
    %72 = arith.mulf %69, %71 : vector<16x8xf32>
    %73 = tpu.concatenate %30, %44, %58, %72 in 1 : vector<16x8xf32>, vector<16x8xf32>, vector<16x8xf32>, vector<16x8xf32> -> vector<16x32xf32>
    %74 = vector.extract_strided_slice %73 {offsets = [0, 0], sizes = [8, 32], strides = [1, 1]} : vector<16x32xf32> to vector<8x32xf32>
    %75 = vector.extract_strided_slice %5 {offsets = [0, 0], sizes = [8, 64], strides = [1, 1]} : vector<16x64xf32> to vector<8x64xf32>
    %cst_19 = arith.constant dense<0.000000e+00> : vector<64x32xf32>
    %76 = tpu.matmul %75, %74, %cst_19 {dimension_numbers = #tpu.dot_dimension_numbers<[0], [0], [1], [1], [0, 1, 1, 1], [], []>} : vector<8x64xf32>, vector<8x32xf32>, vector<64x32xf32> -> vector<64x32xf32>
    %77 = vector.extract_strided_slice %76 {offsets = [0, 0], sizes = [16, 8], strides = [1, 1]} : vector<64x32xf32> to vector<16x8xf32>
    %78 = vector.extract_strided_slice %76 {offsets = [16, 8], sizes = [16, 8], strides = [1, 1]} : vector<64x32xf32> to vector<16x8xf32>
    %79 = arith.addf %77, %78 : vector<16x8xf32>
    %80 = vector.extract_strided_slice %76 {offsets = [32, 16], sizes = [16, 8], strides = [1, 1]} : vector<64x32xf32> to vector<16x8xf32>
    %81 = arith.addf %79, %80 : vector<16x8xf32>
    %82 = vector.extract_strided_slice %76 {offsets = [48, 24], sizes = [16, 8], strides = [1, 1]} : vector<64x32xf32> to vector<16x8xf32>
    %83 = arith.addf %81, %82 : vector<16x8xf32>
    %cst_20 = arith.constant dense<0.000000e+00> : vector<32xf32>
    %84 = vector.multi_reduction <add>, %74, %cst_20 [0] : vector<8x32xf32> to vector<32xf32>
    %85 = vector.shape_cast %84 : vector<32xf32> to vector<1x32xf32>
    %86 = vector.extract_strided_slice %85 {offsets = [0, 0], sizes = [1, 8], strides = [1, 1]} : vector<1x32xf32> to vector<1x8xf32>
    %87 = vector.extract_strided_slice %85 {offsets = [0, 8], sizes = [1, 8], strides = [1, 1]} : vector<1x32xf32> to vector<1x8xf32>
    %88 = arith.addf %86, %87 : vector<1x8xf32>
    %89 = vector.extract_strided_slice %85 {offsets = [0, 16], sizes = [1, 8], strides = [1, 1]} : vector<1x32xf32> to vector<1x8xf32>
    %90 = arith.addf %88, %89 : vector<1x8xf32>
    %91 = vector.extract_strided_slice %85 {offsets = [0, 24], sizes = [1, 8], strides = [1, 1]} : vector<1x32xf32> to vector<1x8xf32>
    %92 = arith.addf %90, %91 : vector<1x8xf32>
    %c0_21 = arith.constant 0 : index
    %c0_22 = arith.constant 0 : index
    %93 = vector.load %arg6[%c0_21, %c0_22] : memref<16x8xf32, #tpu.memory_space<vmem>>, vector<16x8xf32>
    %94 = vector.broadcast %92 : vector<1x8xf32> to vector<16x8xf32>
    %95 = arith.mulf %94, %93 : vector<16x8xf32>
    %96 = arith.subf %83, %95 : vector<16x8xf32>
    %97 = arith.mulf %96, %96 : vector<16x8xf32>
    %cst_23 = arith.constant dense<0.000000e+00> : vector<8xf32>
    %98 = vector.multi_reduction <add>, %97, %cst_23 [0] : vector<16x8xf32> to vector<8xf32>
    %99 = vector.shape_cast %98 : vector<8xf32> to vector<1x8xf32>
    %cst_24 = arith.constant 1.000000e-24 : f32
    %100 = vector.broadcast %cst_24 : f32 to vector<1x8xf32>
    %101 = arith.maximumf %99, %100 : vector<1x8xf32>
    %102 = math.rsqrt %101 : vector<1x8xf32>
    %103 = vector.broadcast %102 : vector<1x8xf32> to vector<16x8xf32>
    %104 = arith.mulf %96, %103 : vector<16x8xf32>
    %c0_25 = arith.constant 0 : index
    %c0_26 = arith.constant 0 : index
    %105 = vector.load %arg7[%c0_25, %c0_26] : memref<16x128xf32, #tpu.memory_space<vmem>>, vector<16x128xf32>
    %cst_27 = arith.constant dense<0.000000e+00> : vector<8x128xf32>
    %106 = tpu.matmul %104, %105, %cst_27 {dimension_numbers = #tpu.dot_dimension_numbers<[0], [0], [1], [1], [0, 1, 1, 1], [], []>} : vector<16x8xf32>, vector<16x128xf32>, vector<8x128xf32> -> vector<8x128xf32>
    %c0_28 = arith.constant 0 : index
    %c0_29 = arith.constant 0 : index
    %107 = vector.load %arg8[%c0_28, %c0_29] : memref<1x16xf32, #tpu.memory_space<vmem>>, vector<1x16xf32>
    %108 = vector.extract_strided_slice %106 {offsets = [0, 0], sizes = [1, 16], strides = [1, 1]} : vector<8x128xf32> to vector<1x16xf32>
    %109 = arith.addf %107, %108 : vector<1x16xf32>
    %110 = vector.extract_strided_slice %106 {offsets = [1, 16], sizes = [1, 16], strides = [1, 1]} : vector<8x128xf32> to vector<1x16xf32>
    %111 = arith.addf %109, %110 : vector<1x16xf32>
    %112 = vector.extract_strided_slice %106 {offsets = [2, 32], sizes = [1, 16], strides = [1, 1]} : vector<8x128xf32> to vector<1x16xf32>
    %113 = arith.addf %111, %112 : vector<1x16xf32>
    %114 = vector.extract_strided_slice %106 {offsets = [3, 48], sizes = [1, 16], strides = [1, 1]} : vector<8x128xf32> to vector<1x16xf32>
    %115 = arith.addf %113, %114 : vector<1x16xf32>
    %116 = vector.extract_strided_slice %106 {offsets = [4, 64], sizes = [1, 16], strides = [1, 1]} : vector<8x128xf32> to vector<1x16xf32>
    %117 = arith.addf %115, %116 : vector<1x16xf32>
    %118 = vector.extract_strided_slice %106 {offsets = [5, 80], sizes = [1, 16], strides = [1, 1]} : vector<8x128xf32> to vector<1x16xf32>
    %119 = arith.addf %117, %118 : vector<1x16xf32>
    %120 = vector.extract_strided_slice %106 {offsets = [6, 96], sizes = [1, 16], strides = [1, 1]} : vector<8x128xf32> to vector<1x16xf32>
    %121 = arith.addf %119, %120 : vector<1x16xf32>
    %122 = vector.extract_strided_slice %106 {offsets = [7, 112], sizes = [1, 16], strides = [1, 1]} : vector<8x128xf32> to vector<1x16xf32>
    %123 = arith.addf %121, %122 : vector<1x16xf32>
    %124 = vector.extract_strided_slice %73 {offsets = [8, 0], sizes = [8, 32], strides = [1, 1]} : vector<16x32xf32> to vector<8x32xf32>
    %125 = vector.extract_strided_slice %5 {offsets = [8, 0], sizes = [8, 64], strides = [1, 1]} : vector<16x64xf32> to vector<8x64xf32>
    %cst_30 = arith.constant dense<0.000000e+00> : vector<64x32xf32>
    %126 = tpu.matmul %125, %124, %cst_30 {dimension_numbers = #tpu.dot_dimension_numbers<[0], [0], [1], [1], [0, 1, 1, 1], [], []>} : vector<8x64xf32>, vector<8x32xf32>, vector<64x32xf32> -> vector<64x32xf32>
    %127 = vector.extract_strided_slice %126 {offsets = [0, 0], sizes = [16, 8], strides = [1, 1]} : vector<64x32xf32> to vector<16x8xf32>
    %128 = vector.extract_strided_slice %126 {offsets = [16, 8], sizes = [16, 8], strides = [1, 1]} : vector<64x32xf32> to vector<16x8xf32>
    %129 = arith.addf %127, %128 : vector<16x8xf32>
    %130 = vector.extract_strided_slice %126 {offsets = [32, 16], sizes = [16, 8], strides = [1, 1]} : vector<64x32xf32> to vector<16x8xf32>
    %131 = arith.addf %129, %130 : vector<16x8xf32>
    %132 = vector.extract_strided_slice %126 {offsets = [48, 24], sizes = [16, 8], strides = [1, 1]} : vector<64x32xf32> to vector<16x8xf32>
    %133 = arith.addf %131, %132 : vector<16x8xf32>
    %cst_31 = arith.constant dense<0.000000e+00> : vector<32xf32>
    %134 = vector.multi_reduction <add>, %124, %cst_31 [0] : vector<8x32xf32> to vector<32xf32>
    %135 = vector.shape_cast %134 : vector<32xf32> to vector<1x32xf32>
    %136 = vector.extract_strided_slice %135 {offsets = [0, 0], sizes = [1, 8], strides = [1, 1]} : vector<1x32xf32> to vector<1x8xf32>
    %137 = vector.extract_strided_slice %135 {offsets = [0, 8], sizes = [1, 8], strides = [1, 1]} : vector<1x32xf32> to vector<1x8xf32>
    %138 = arith.addf %136, %137 : vector<1x8xf32>
    %139 = vector.extract_strided_slice %135 {offsets = [0, 16], sizes = [1, 8], strides = [1, 1]} : vector<1x32xf32> to vector<1x8xf32>
    %140 = arith.addf %138, %139 : vector<1x8xf32>
    %141 = vector.extract_strided_slice %135 {offsets = [0, 24], sizes = [1, 8], strides = [1, 1]} : vector<1x32xf32> to vector<1x8xf32>
    %142 = arith.addf %140, %141 : vector<1x8xf32>
    %c0_32 = arith.constant 0 : index
    %c0_33 = arith.constant 0 : index
    %143 = vector.load %arg6[%c0_32, %c0_33] : memref<16x8xf32, #tpu.memory_space<vmem>>, vector<16x8xf32>
    %144 = vector.broadcast %142 : vector<1x8xf32> to vector<16x8xf32>
    %145 = arith.mulf %144, %143 : vector<16x8xf32>
    %146 = arith.subf %133, %145 : vector<16x8xf32>
    %147 = arith.mulf %146, %146 : vector<16x8xf32>
    %cst_34 = arith.constant dense<0.000000e+00> : vector<8xf32>
    %148 = vector.multi_reduction <add>, %147, %cst_34 [0] : vector<16x8xf32> to vector<8xf32>
    %149 = vector.shape_cast %148 : vector<8xf32> to vector<1x8xf32>
    %cst_35 = arith.constant 1.000000e-24 : f32
    %150 = vector.broadcast %cst_35 : f32 to vector<1x8xf32>
    %151 = arith.maximumf %149, %150 : vector<1x8xf32>
    %152 = math.rsqrt %151 : vector<1x8xf32>
    %153 = vector.broadcast %152 : vector<1x8xf32> to vector<16x8xf32>
    %154 = arith.mulf %146, %153 : vector<16x8xf32>
    %c0_36 = arith.constant 0 : index
    %c0_37 = arith.constant 0 : index
    %155 = vector.load %arg7[%c0_36, %c0_37] : memref<16x128xf32, #tpu.memory_space<vmem>>, vector<16x128xf32>
    %cst_38 = arith.constant dense<0.000000e+00> : vector<8x128xf32>
    %156 = tpu.matmul %154, %155, %cst_38 {dimension_numbers = #tpu.dot_dimension_numbers<[0], [0], [1], [1], [0, 1, 1, 1], [], []>} : vector<16x8xf32>, vector<16x128xf32>, vector<8x128xf32> -> vector<8x128xf32>
    %c0_39 = arith.constant 0 : index
    %c0_40 = arith.constant 0 : index
    %157 = vector.load %arg8[%c0_39, %c0_40] : memref<1x16xf32, #tpu.memory_space<vmem>>, vector<1x16xf32>
    %158 = vector.extract_strided_slice %156 {offsets = [0, 0], sizes = [1, 16], strides = [1, 1]} : vector<8x128xf32> to vector<1x16xf32>
    %159 = arith.addf %157, %158 : vector<1x16xf32>
    %160 = vector.extract_strided_slice %156 {offsets = [1, 16], sizes = [1, 16], strides = [1, 1]} : vector<8x128xf32> to vector<1x16xf32>
    %161 = arith.addf %159, %160 : vector<1x16xf32>
    %162 = vector.extract_strided_slice %156 {offsets = [2, 32], sizes = [1, 16], strides = [1, 1]} : vector<8x128xf32> to vector<1x16xf32>
    %163 = arith.addf %161, %162 : vector<1x16xf32>
    %164 = vector.extract_strided_slice %156 {offsets = [3, 48], sizes = [1, 16], strides = [1, 1]} : vector<8x128xf32> to vector<1x16xf32>
    %165 = arith.addf %163, %164 : vector<1x16xf32>
    %166 = vector.extract_strided_slice %156 {offsets = [4, 64], sizes = [1, 16], strides = [1, 1]} : vector<8x128xf32> to vector<1x16xf32>
    %167 = arith.addf %165, %166 : vector<1x16xf32>
    %168 = vector.extract_strided_slice %156 {offsets = [5, 80], sizes = [1, 16], strides = [1, 1]} : vector<8x128xf32> to vector<1x16xf32>
    %169 = arith.addf %167, %168 : vector<1x16xf32>
    %170 = vector.extract_strided_slice %156 {offsets = [6, 96], sizes = [1, 16], strides = [1, 1]} : vector<8x128xf32> to vector<1x16xf32>
    %171 = arith.addf %169, %170 : vector<1x16xf32>
    %172 = vector.extract_strided_slice %156 {offsets = [7, 112], sizes = [1, 16], strides = [1, 1]} : vector<8x128xf32> to vector<1x16xf32>
    %173 = arith.addf %171, %172 : vector<1x16xf32>
    %174 = tpu.concatenate %123, %173 in 0 : vector<1x16xf32>, vector<1x16xf32> -> vector<2x16xf32>
    %c0_41 = arith.constant 0 : index
    %c0_42 = arith.constant 0 : index
    %175 = vector.load %arg9[%c0_41, %c0_42] : memref<2x16xf32, #tpu.memory_space<vmem>>, vector<2x16xf32>
    tpu.vector_store %arg9[%c0_41, %c0_42], %174 {strides = array<i32>} : memref<2x16xf32, #tpu.memory_space<vmem>>, vector<2x16xf32>,
    return
  }
  func.func @transform_0(%arg0: i32) -> (i32, i32) {
    %c0_i32 = arith.constant 0 : i32
    %c0_i32_0 = arith.constant 0 : i32
    %c0_i32_1 = arith.constant 0 : i32
    return %c0_i32, %c0_i32_0 : i32, i32
  }
  func.func @transform_1(%arg0: i32) -> (i32, i32) {
    %c0_i32 = arith.constant 0 : i32
    %c0_i32_0 = arith.constant 0 : i32
    %c0_i32_1 = arith.constant 0 : i32
    return %c0_i32, %c0_i32_0 : i32, i32
  }
  func.func @transform_2(%arg0: i32) -> (i32, i32) {
    %c0_i32 = arith.constant 0 : i32
    %c0_i32_0 = arith.constant 0 : i32
    %c0_i32_1 = arith.constant 0 : i32
    return %c0_i32, %c0_i32_0 : i32, i32
  }
  func.func @transform_3(%arg0: i32) -> (i32, i32) {
    %c0_i32 = arith.constant 0 : i32
    %c0_i32_0 = arith.constant 0 : i32
    %c0_i32_1 = arith.constant 0 : i32
    return %c0_i32, %c0_i32_0 : i32, i32
  }
  func.func @transform_4(%arg0: i32) -> (i32, i32) {
    %c0_i32 = arith.constant 0 : i32
    %c0_i32_0 = arith.constant 0 : i32
    %c0_i32_1 = arith.constant 0 : i32
    return %c0_i32, %c0_i32_0 : i32, i32
  }
  func.func @transform_5(%arg0: i32) -> (i32, i32) {
    %c0_i32 = arith.constant 0 : i32
    %c0_i32_0 = arith.constant 0 : i32
    %c0_i32_1 = arith.constant 0 : i32
    return %c0_i32, %c0_i32_0 : i32, i32
  }
  func.func @transform_6(%arg0: i32) -> (i32, i32) {
    %c0_i32 = arith.constant 0 : i32
    %c0_i32_0 = arith.constant 0 : i32
    %c0_i32_1 = arith.constant 0 : i32
    return %c0_i32, %c0_i32_0 : i32, i32
  }
  func.func @transform_7(%arg0: i32) -> (i32, i32) {
    %c0_i32 = arith.constant 0 : i32
    %c0_i32_0 = arith.constant 0 : i32
    %c0_i32_1 = arith.constant 0 : i32
    return %c0_i32, %c0_i32_0 : i32, i32
  }
  func.func @transform_8(%arg0: i32) -> (i32, i32) {
    %c0_i32 = arith.constant 0 : i32
    %c0_i32_0 = arith.constant 0 : i32
    %c0_i32_1 = arith.constant 0 : i32
    return %c0_i32, %c0_i32_0 : i32, i32
  }
}

</mosaic_0001>

<llo_original>
// kernel: tpu_custom_call.1
$region0: #{tpu_custom_call.1}
  #allocation0 [shape = 'u32[]', space=smem, size = 0x4, offset = 0x4, fixed_abs, tag = 'smem constant byte address 0x4 - core index']
  #allocation1 [shape = 'u32[144,128]{1,0:T(1,128)}', space=vmem, size = 0x12000, scoped, tag = 'internal scratch']
  %s0 = inlined_call_operand.vmem [shape: f32[16,32], index: 0, kind: input, shape index: {}]
  %s1 = inlined_call_operand.vmem [shape: f32[32,64], index: 1, kind: input, shape index: {}]
  %s2 = inlined_call_operand.vmem [shape: f32[1,64], index: 2, kind: input, shape index: {}]
  %s3 = inlined_call_operand.vmem [shape: f32[64,36], index: 3, kind: input, shape index: {}]
  %s4 = inlined_call_operand.vmem [shape: f32[1,4], index: 4, kind: input, shape index: {}]
  %s5 = inlined_call_operand.vmem [shape: f32[16,8], index: 5, kind: input, shape index: {}]
  %s6 = inlined_call_operand.vmem [shape: f32[16,128], index: 6, kind: input, shape index: {}]
  %s7 = inlined_call_operand.vmem [shape: f32[1,16], index: 7, kind: input, shape index: {}]
  %s8 = inlined_call_operand.hbm [shape: f32[2,16], index: 8, kind: output, shape index: {}]
  %s9 = sld [smem:[#allocation0]]
  $region42: #{tpu_custom_call.1} parent=0
    _
  %s11 = ssub.s32 1, %s9
  %s12 = scalar_select 0, %s11, %s9
  $region1: #{tpu_custom_call.1} parent=0
    #allocation2 [shape = 'u8[1024]{0}', space=vmem, size = 0x400, scoped, tag = 'output window, operand 0, single buffered']
    #allocation3 [shape = 's32[1]{0}', space=sflag, size = 0x4, scoped, tag = 'scoped memory for tpu_custom_call.1']
    %13 = vsyncpa [#allocation3], 0
    // Predicated region
    $region2: #{tpu_custom_call.1} parent=1 // pred_check
      _
    $region3: #{tpu_custom_call.1} parent=1 // pred_check_branch
      %15 = sbr.rel (0) target = $region5
    $region4: #{tpu_custom_call.1} parent=1 // pred_region
      _
    $region5: #{tpu_custom_call.1} parent=1 // pred_fallthru
      _
    // Predicated region
    $region6: #{tpu_custom_call.1} parent=1 // pred_check
      _
    $region7: #{tpu_custom_call.1} parent=1 // pred_check_branch
      %17 = sbr.rel (0) target = $region9
    $region8: #{tpu_custom_call.1} parent=1 // pred_region
      _
    $region9: #{tpu_custom_call.1} parent=1 // pred_fallthru
      _
    // Predicated region
    $region10: #{tpu_custom_call.1} parent=1 // pred_check
      _
    $region11: #{tpu_custom_call.1} parent=1 // pred_check_branch
      %19 = sbr.rel (0) target = $region13
    $region12: #{tpu_custom_call.1} parent=1 // pred_region
      _
    $region13: #{tpu_custom_call.1} parent=1 // pred_fallthru
      _
    // Predicated region
    $region14: #{tpu_custom_call.1} parent=1 // pred_check
      _
    $region15: #{tpu_custom_call.1} parent=1 // pred_check_branch
      %21 = sbr.rel (0) target = $region17
    $region16: #{tpu_custom_call.1} parent=1 // pred_region
      _
    $region17: #{tpu_custom_call.1} parent=1 // pred_fallthru
      _
    // Predicated region
    $region18: #{tpu_custom_call.1} parent=1 // pred_check
      _
    $region19: #{tpu_custom_call.1} parent=1 // pred_check_branch
      %23 = sbr.rel (0) target = $region21
    $region20: #{tpu_custom_call.1} parent=1 // pred_region
      _
    $region21: #{tpu_custom_call.1} parent=1 // pred_fallthru
      _
    // Predicated region
    $region22: #{tpu_custom_call.1} parent=1 // pred_check
      _
    $region23: #{tpu_custom_call.1} parent=1 // pred_check_branch
      %25 = sbr.rel (0) target = $region25
    $region24: #{tpu_custom_call.1} parent=1 // pred_region
      _
    $region25: #{tpu_custom_call.1} parent=1 // pred_fallthru
      _
    // Predicated region
    $region26: #{tpu_custom_call.1} parent=1 // pred_check
      _
    $region27: #{tpu_custom_call.1} parent=1 // pred_check_branch
      %27 = sbr.rel (0) target = $region29
    $region28: #{tpu_custom_call.1} parent=1 // pred_region
      _
    $region29: #{tpu_custom_call.1} parent=1 // pred_fallthru
      _
    // Predicated region
    $region30: #{tpu_custom_call.1} parent=1 // pred_check
      _
    $region31: #{tpu_custom_call.1} parent=1 // pred_check_branch
      %29 = sbr.rel (0) target = $region33
    $region32: #{tpu_custom_call.1} parent=1 // pred_region
      _
    $region33: #{tpu_custom_call.1} parent=1 // pred_fallthru
      _
    %v30 = vld [vmem:[%s0] sm:$0xff]
    %v31 = vld [vmem:[%s0 + $0x8] sm:$0xff]
    %v32 = vld [vmem:[%s1] sm:$0xff]
    %v33 = vld [vmem:[%s1 + $0x8] sm:$0xff]
    %v34 = vld [vmem:[%s1 + $0x10] sm:$0xff]
    %v35 = vld [vmem:[%s1 + $0x18] sm:$0xff]
    %v36 = vld [vmem:[%s2] sm:$0x1]
    %v38 = vlaneseq
    %v39 = vshrl.u32 %v38, 7
    %v40 = vsub.s32 0, %v39
    %v41 = vrot.slane %v36, %v40
    %vm43 = vcmask 261120
    %v45 = vsel %vm43, %v30, 0
    %v48 = vsel %vm43, %v31, 0
    %50 = vmatprep.subr.mxu0 0.0
    %51 = vmatpush1.msra.mxu0 0.0
    %52 = vmatprep.subr.mxu0 0.0
    %53 = vmatpush1.msra.mxu0 0.0
    %54 = vmatprep.subr.mxu0 0.0
    %55 = vmatpush1.msra.mxu0 0.0
    %56 = vmatprep.subr.mxu0 0.0
    %57 = vmatpush1.msra.mxu0 0.0
    %58 = vmatprep.subr.mxu0 0.0
    %59 = vmatpush1.msra.mxu0 0.0
    %60 = vmatprep.subr.mxu0 0.0
    %61 = vmatpush1.msra.mxu0 0.0
    %62 = vmatprep.subr.mxu0 0.0
    %63 = vmatpush1.msra.mxu0 0.0
    %64 = vmatprep.subr.mxu0 0.0
    %65 = vmatpush1.msra.mxu0 0.0
    %66 = vmatprep.subr.mxu0 0.0
    %67 = vmatpush1.msra.mxu0 0.0
    %68 = vmatprep.subr.mxu0 0.0
    %69 = vmatpush1.msra.mxu0 0.0
    %70 = vmatprep.subr.mxu0 0.0
    %71 = vmatpush1.msra.mxu0 0.0
    %72 = vmatprep.subr.mxu0 0.0
    %73 = vmatpush1.msra.mxu0 0.0
    %74 = vmatprep.subr.mxu0 0.0
    %75 = vmatpush1.msra.mxu0 %v35
    %76 = vmatprep.subr.mxu0 0.0
    %77 = vmatpush1.msra.mxu0 %v34
    %78 = vmatprep.subr.mxu0 0.0
    %79 = vmatpush1.msra.mxu0 %v33
    %80 = vmatprep.subr.mxu0 0.0
    %81 = vmatpush1.msra.mxu0 %v32
    %82 = vmatprep.subr.mxu0 0.0
    %83 = vmatpush2.msra.mxu0 0.0
    %84 = vmatprep.subr.mxu0 0.0
    %85 = vmatpush2.msra.mxu0 0.0
    %86 = vmatprep.subr.mxu0 0.0
    %87 = vmatpush2.msra.mxu0 0.0
    %88 = vmatprep.subr.mxu0 0.0
    %89 = vmatpush2.msra.mxu0 0.0
    %90 = vmatprep.subr.mxu0 0.0
    %91 = vmatpush2.msra.mxu0 0.0
    %92 = vmatprep.subr.mxu0 0.0
    %93 = vmatpush2.msra.mxu0 0.0
    %94 = vmatprep.subr.mxu0 0.0
    %95 = vmatpush2.msra.mxu0 0.0
    %96 = vmatprep.subr.mxu0 0.0
    %97 = vmatpush2.msra.mxu0 0.0
    %98 = vmatprep.subr.mxu0 0.0
    %99 = vmatpush2.msra.mxu0 0.0
    %100 = vmatprep.subr.mxu0 0.0
    %101 = vmatpush2.msra.mxu0 0.0
    %102 = vmatprep.subr.mxu0 0.0
    %103 = vmatpush2.msra.mxu0 0.0
    %104 = vmatprep.subr.mxu0 0.0
    %105 = vmatpush2.msra.mxu0 0.0
    %106 = vmatprep.subr.mxu0 0.0
    %107 = vmatpush2.msra.mxu0 0.0
    %108 = vmatprep.subr.mxu0 0.0
    %109 = vmatpush2.msra.mxu0 0.0
    %110 = vmatprep.subr.mxu0 0.0
    %111 = vmatpush2.msra.mxu0 0.0
    %112 = vmatprep.subr.mxu0 0.0
    %113 = vmatpush2.msra.mxu0 0.0
    %114 = vmatprep.mubr.f32.mxu0 0.0
    %115 = vmatmul.mubr.f32.gmra.mxu0 %v45
    %v116 = vpop.f32.mrf.mxu0
    %v117 = vadd.f32 %v41, %v116
    %v118 = vpop.f32.mrf.mxu0
    %119 = vmatprep.mubr.f32.mxu0 0.0
    %120 = vmatmul.mubr.f32.gmra.mxu0 %v48
    %v121 = vpop.f32.mrf.mxu0
    %v122 = vadd.f32 %v41, %v121
    %v123 = vpop.f32.mrf.mxu0
    %124 = vdwg.mxu0
    %v125 = vld [vmem:[%s3] sm:$0xff]
    %v126 = vld [vmem:[%s3 + $0x8] sm:$0xff]
    %v127 = vld [vmem:[%s3 + $0x10] sm:$0xff]
    %v128 = vld [vmem:[%s3 + $0x18] sm:$0xff]
    %v129 = vld [vmem:[%s3 + $0x20] sm:$0xff]
    %v130 = vld [vmem:[%s3 + $0x28] sm:$0xff]
    %v131 = vld [vmem:[%s3 + $0x30] sm:$0xff]
    %v132 = vld [vmem:[%s3 + $0x38] sm:$0xff]
    %vm133 = vcmask 523264
    %v135 = vsel %vm133, %v117, 0
    %v138 = vsel %vm133, %v122, 0
    %140 = vmatprep.subr.mxu0 0.0
    %141 = vmatpush1.msra.mxu0 0.0
    %142 = vmatprep.subr.mxu0 0.0
    %143 = vmatpush1.msra.mxu0 0.0
    %144 = vmatprep.subr.mxu0 0.0
    %145 = vmatpush1.msra.mxu0 0.0
    %146 = vmatprep.subr.mxu0 0.0
    %147 = vmatpush1.msra.mxu0 0.0
    %148 = vmatprep.subr.mxu0 0.0
    %149 = vmatpush1.msra.mxu0 0.0
    %150 = vmatprep.subr.mxu0 0.0
    %151 = vmatpush1.msra.mxu0 0.0
    %152 = vmatprep.subr.mxu0 0.0
    %153 = vmatpush1.msra.mxu0 0.0
    %154 = vmatprep.subr.mxu0 0.0
    %155 = vmatpush1.msra.mxu0 0.0
    %156 = vmatprep.subr.mxu0 0.0
    %157 = vmatpush1.msra.mxu0 %v132
    %158 = vmatprep.subr.mxu0 0.0
    %159 = vmatpush1.msra.mxu0 %v131
    %160 = vmatprep.subr.mxu0 0.0
    %161 = vmatpush1.msra.mxu0 %v130
    %162 = vmatprep.subr.mxu0 0.0
    %163 = vmatpush1.msra.mxu0 %v129
    %164 = vmatprep.subr.mxu0 0.0
    %165 = vmatpush1.msra.mxu0 %v128
    %166 = vmatprep.subr.mxu0 0.0
    %167 = vmatpush1.msra.mxu0 %v127
    %168 = vmatprep.subr.mxu0 0.0
    %169 = vmatpush1.msra.mxu0 %v126
    %170 = vmatprep.subr.mxu0 0.0
    %171 = vmatpush1.msra.mxu0 %v125
    %172 = vmatprep.subr.mxu0 0.0
    %173 = vmatpush2.msra.mxu0 0.0
    %174 = vmatprep.subr.mxu0 0.0
    %175 = vmatpush2.msra.mxu0 0.0
    %176 = vmatprep.subr.mxu0 0.0
    %177 = vmatpush2.msra.mxu0 0.0
    %178 = vmatprep.subr.mxu0 0.0
    %179 = vmatpush2.msra.mxu0 0.0
    %180 = vmatprep.subr.mxu0 0.0
    %181 = vmatpush2.msra.mxu0 0.0
    %182 = vmatprep.subr.mxu0 0.0
    %183 = vmatpush2.msra.mxu0 0.0
    %184 = vmatprep.subr.mxu0 0.0
    %185 = vmatpush2.msra.mxu0 0.0
    %186 = vmatprep.subr.mxu0 0.0
    %187 = vmatpush2.msra.mxu0 0.0
    %188 = vmatprep.subr.mxu0 0.0
    %189 = vmatpush2.msra.mxu0 0.0
    %190 = vmatprep.subr.mxu0 0.0
    %191 = vmatpush2.msra.mxu0 0.0
    %192 = vmatprep.subr.mxu0 0.0
    %193 = vmatpush2.msra.mxu0 0.0
    %194 = vmatprep.subr.mxu0 0.0
    %195 = vmatpush2.msra.mxu0 0.0
    %196 = vmatprep.subr.mxu0 0.0
    %197 = vmatpush2.msra.mxu0 0.0
    %198 = vmatprep.subr.mxu0 0.0
    %199 = vmatpush2.msra.mxu0 0.0
    %200 = vmatprep.subr.mxu0 0.0
    %201 = vmatpush2.msra.mxu0 0.0
    %202 = vmatprep.subr.mxu0 0.0
    %203 = vmatpush2.msra.mxu0 0.0
    %204 = vmatprep.mubr.f32.mxu0 0.0
    %205 = vmatmul.mubr.f32.gmra.mxu0 %v135
    %v206 = vpop.f32.mrf.mxu0
    %v207 = vadd.f32 0.0, %v206
    %v208 = vpop.f32.mrf.mxu0
    %209 = vmatprep.mubr.f32.mxu0 0.0
    %210 = vmatmul.mubr.f32.gmra.mxu0 %v138
    %v211 = vpop.f32.mrf.mxu0
    %v212 = vadd.f32 0.0, %v211
    %v213 = vpop.f32.mrf.mxu0
    %214 = vdwg.mxu0
    %v215 = vld [vmem:[%s4] sm:$0x1]
    %v217 = vlaneseq
    %v218 = vshrl.u32 %v217, 7
    %v219 = vsub.s32 0, %v218
    %v220 = vrot.slane %v215, %v219
    %221 = vrot.lane.b32.xlu0 %v220, 32
    %v222 = vpop.permute.xlu0 %221
    %v224 = vadd.f32 %v207, %v222
    %v225 = vadd.f32 %v212, %v222
    %v226 = vxor.u32 %v224, 2147483648
    %v227 = vxor.u32 %v225, 2147483648
    %v228 = vmul.f32 %v226, 1.442695
    %v229 = vpow.pop %v228
    %v230 = vmul.f32 %v227, 1.442695
    %v231 = vpow.pop %v230
    %v232 = vadd.f32 %v229, 1.0
    %v233 = vadd.f32 %v231, 1.0
    %v234 = vrcp.pop %v232
    %v235 = vmul.f32 1.0, %v234
    %v236 = vrcp.pop %v233
    %v237 = vmul.f32 1.0, %v236
    %vm238 = vcmask 64512
    %v239 = vsel %vm238, %v207, -inf
    %240 = vmax.xlane.f32.xlu0 %v239
    %v241 = vpop.xlane.xlu0 %240
    %v242 = vsel %vm238, %v212, -inf
    %243 = vmax.xlane.f32.xlu0 %v242
    %v244 = vpop.xlane.xlu0 %243
    %v245 = vsub.f32 %v207, %v241
    %v246 = vsub.f32 %v212, %v244
    %v247 = vmul.f32 %v245, 1.442695
    %v248 = vpow.pop %v247
    %v249 = vmul.f32 %v246, 1.442695
    %v250 = vpow.pop %v249
    %v251 = vsel %vm238, %v248, 0.0
    %252 = vadd.xlane.f32.xlu0 %v251
    %v253 = vpop.xlane.xlu0 %252
    %v254 = vsel %vm238, %v250, 0.0
    %255 = vadd.xlane.f32.xlu0 %v254
    %v256 = vpop.xlane.xlu0 %255
    %v257 = vrcp.pop %v253
    %v258 = vrcp.pop %v256
    %v259 = vmul.f32 %v248, %v257
    %v260 = vmul.f32 %v250, %v258
    %262 = vset.pattern.permute.xlu0 32
    %263 = vperm.xlu0 %262, %v235
    %v264 = vpop.permute.xlu0 %263
    %267 = vset.pattern.permute.xlu0 32
    %268 = vperm.xlu0 %267, %v237
    %v269 = vpop.permute.xlu0 %268
    %v271 = vmul.f32 %v259, %v264
    %v272 = vmul.f32 %v260, %v269
    %vm273 = vcmask 130112
    %v274 = vsel %vm273, %v207, -inf
    %275 = vmax.xlane.f32.xlu0 %v274
    %v276 = vpop.xlane.xlu0 %275
    %v277 = vsel %vm273, %v212, -inf
    %278 = vmax.xlane.f32.xlu0 %v277
    %v279 = vpop.xlane.xlu0 %278
    %v280 = vsub.f32 %v207, %v276
    %v281 = vsub.f32 %v212, %v279
    %v282 = vmul.f32 %v280, 1.442695
    %v283 = vpow.pop %v282
    %v284 = vmul.f32 %v281, 1.442695
    %v285 = vpow.pop %v284
    %288 = vrot.lane.b32.xlu0 %v283, 120
    %v289 = vpop.permute.xlu0 %288
    %290 = vrot.lane.b32.xlu0 %v285, 120
    %v291 = vpop.permute.xlu0 %290
    %v294 = vsel %vm238, %v289, 0.0
    %295 = vadd.xlane.f32.xlu0 %v294
    %v296 = vpop.xlane.xlu0 %295
    %v297 = vsel %vm238, %v291, 0.0
    %298 = vadd.xlane.f32.xlu0 %v297
    %v299 = vpop.xlane.xlu0 %298
    %v300 = vrcp.pop %v296
    %v301 = vrcp.pop %v299
    %v302 = vmul.f32 %v283, %v300
    %v303 = vmul.f32 %v285, %v301
    %304 = vset.pattern.permute.xlu0 33
    %305 = vperm.xlu0 %304, %v235
    %v306 = vpop.permute.xlu0 %305
    %308 = vset.pattern.permute.xlu0 33
    %309 = vperm.xlu0 %308, %v237
    %v310 = vpop.permute.xlu0 %309
    %v312 = vmul.f32 %v302, %v306
    %v313 = vmul.f32 %v303, %v310
    %vm314 = vcmask 195712
    %v315 = vsel %vm314, %v207, -inf
    %316 = vmax.xlane.f32.xlu0 %v315
    %v317 = vpop.xlane.xlu0 %316
    %v318 = vsel %vm314, %v212, -inf
    %319 = vmax.xlane.f32.xlu0 %v318
    %v320 = vpop.xlane.xlu0 %319
    %v321 = vsub.f32 %v207, %v317
    %v322 = vsub.f32 %v212, %v320
    %v323 = vmul.f32 %v321, 1.442695
    %v324 = vpow.pop %v323
    %v325 = vmul.f32 %v322, 1.442695
    %v326 = vpow.pop %v325
    %329 = vrot.lane.b32.xlu0 %v324, 112
    %v330 = vpop.permute.xlu0 %329
    %331 = vrot.lane.b32.xlu0 %v326, 112
    %v332 = vpop.permute.xlu0 %331
    %v335 = vsel %vm238, %v330, 0.0
    %336 = vadd.xlane.f32.xlu0 %v335
    %v337 = vpop.xlane.xlu0 %336
    %v338 = vsel %vm238, %v332, 0.0
    %339 = vadd.xlane.f32.xlu0 %v338
    %v340 = vpop.xlane.xlu0 %339
    %v341 = vrcp.pop %v337
    %v342 = vrcp.pop %v340
    %v343 = vmul.f32 %v324, %v341
    %v344 = vmul.f32 %v326, %v342
    %345 = vset.pattern.permute.xlu0 34
    %346 = vperm.xlu0 %345, %v235
    %v347 = vpop.permute.xlu0 %346
    %349 = vset.pattern.permute.xlu0 34
    %350 = vperm.xlu0 %349, %v237
    %v351 = vpop.permute.xlu0 %350
    %v353 = vmul.f32 %v343, %v347
    %v354 = vmul.f32 %v344, %v351
    %vm355 = vcmask 261312
    %v356 = vsel %vm355, %v207, -inf
    %357 = vmax.xlane.f32.xlu0 %v356
    %v358 = vpop.xlane.xlu0 %357
    %v359 = vsel %vm355, %v212, -inf
    %360 = vmax.xlane.f32.xlu0 %v359
    %v361 = vpop.xlane.xlu0 %360
    %v362 = vsub.f32 %v207, %v358
    %v363 = vsub.f32 %v212, %v361
    %v364 = vmul.f32 %v362, 1.442695
    %v365 = vpow.pop %v364
    %v366 = vmul.f32 %v363, 1.442695
    %v367 = vpow.pop %v366
    %370 = vrot.lane.b32.xlu0 %v365, 104
    %v371 = vpop.permute.xlu0 %370
    %372 = vrot.lane.b32.xlu0 %v367, 104
    %v373 = vpop.permute.xlu0 %372
    %v376 = vsel %vm238, %v371, 0.0
    %377 = vadd.xlane.f32.xlu0 %v376
    %v378 = vpop.xlane.xlu0 %377
    %v379 = vsel %vm238, %v373, 0.0
    %380 = vadd.xlane.f32.xlu0 %v379
    %v381 = vpop.xlane.xlu0 %380
    %v382 = vrcp.pop %v378
    %v383 = vrcp.pop %v381
    %v384 = vmul.f32 %v365, %v382
    %v385 = vmul.f32 %v367, %v383
    %386 = vset.pattern.permute.xlu0 35
    %387 = vperm.xlu0 %386, %v235
    %v388 = vpop.permute.xlu0 %387
    %390 = vset.pattern.permute.xlu0 35
    %391 = vperm.xlu0 %390, %v237
    %v392 = vpop.permute.xlu0 %391
    %v394 = vmul.f32 %v384, %v388
    %v395 = vmul.f32 %v385, %v392
    %v396 = vsel %vm238, %v271, %v312
    %v397 = vsel %vm238, %v272, %v313
    %vm398 = vcmask 130048
    %v399 = vsel %vm398, %v396, %v353
    %v400 = vsel %vm398, %v397, %v354
    %vm401 = vcmask 195584
    %v402 = vsel %vm401, %v399, %v394
    %v403 = vsel %vm401, %v400, %v395
    %404 = vxpose.xlu0.b32.start [1/16] %v117, 128
    %405 = vxpose.xlu0.b32.cont [2/16] 0.0, 128
    %406 = vxpose.xlu0.b32.cont [3/16] 0.0, 128
    %407 = vxpose.xlu0.b32.cont [4/16] 0.0, 128
    %408 = vxpose.xlu0.b32.cont [5/16] 0.0, 128
    %409 = vxpose.xlu0.b32.cont [6/16] 0.0, 128
    %410 = vxpose.xlu0.b32.cont [7/16] 0.0, 128
    %411 = vxpose.xlu0.b32.cont [8/16] 0.0, 128
    %412 = vxpose.xlu0.b32.cont [9/16] 0.0, 128
    %413 = vxpose.xlu0.b32.cont [10/16] 0.0, 128
    %414 = vxpose.xlu0.b32.cont [11/16] 0.0, 128
    %415 = vxpose.xlu0.b32.cont [12/16] 0.0, 128
    %416 = vxpose.xlu0.b32.cont [13/16] 0.0, 128
    %417 = vxpose.xlu0.b32.cont [14/16] 0.0, 128
    %418 = vxpose.xlu0.b32.cont [15/16] 0.0, 128
    %419 = vxpose.xlu0.b32.end [16/16] 0.0, 128
    %v420 = vpop.trf.xlu0
    %v421 = vpop.trf.xlu0
    %v422 = vpop.trf.xlu0
    %v423 = vpop.trf.xlu0
    %v424 = vpop.trf.xlu0
    %v425 = vpop.trf.xlu0
    %v426 = vpop.trf.xlu0
    %v427 = vpop.trf.xlu0
    %v428 = vpop.trf.xlu0
    %v429 = vpop.trf.xlu0
    %v430 = vpop.trf.xlu0
    %v431 = vpop.trf.xlu0
    %v432 = vpop.trf.xlu0
    %v433 = vpop.trf.xlu0
    %v434 = vpop.trf.xlu0
    %v435 = vpop.trf.xlu0
    %v437 = vsel %vm238, %v420, 0
    %v440 = vsel %vm238, %v421, 0
    %v443 = vsel %vm238, %v422, 0
    %v446 = vsel %vm238, %v423, 0
    %v449 = vsel %vm238, %v424, 0
    %v452 = vsel %vm238, %v425, 0
    %v455 = vsel %vm238, %v426, 0
    %v458 = vsel %vm238, %v427, 0
    %460 = vmatprep.subr.mxu0 0.0
    %461 = vmatpush1.msra.mxu0 0.0
    %462 = vmatprep.subr.mxu0 0.0
    %463 = vmatpush1.msra.mxu0 0.0
    %464 = vmatprep.subr.mxu0 0.0
    %465 = vmatpush1.msra.mxu0 0.0
    %466 = vmatprep.subr.mxu0 0.0
    %467 = vmatpush1.msra.mxu0 0.0
    %468 = vmatprep.subr.mxu0 0.0
    %469 = vmatpush1.msra.mxu0 0.0
    %470 = vmatprep.subr.mxu0 0.0
    %471 = vmatpush1.msra.mxu0 0.0
    %472 = vmatprep.subr.mxu0 0.0
    %473 = vmatpush1.msra.mxu0 0.0
    %474 = vmatprep.subr.mxu0 0.0
    %475 = vmatpush1.msra.mxu0 0.0
    %476 = vmatprep.subr.mxu0 0.0
    %477 = vmatpush1.msra.mxu0 0.0
    %478 = vmatprep.subr.mxu0 0.0
    %479 = vmatpush1.msra.mxu0 0.0
    %480 = vmatprep.subr.mxu0 0.0
    %481 = vmatpush1.msra.mxu0 0.0
    %482 = vmatprep.subr.mxu0 0.0
    %483 = vmatpush1.msra.mxu0 0.0
    %484 = vmatprep.subr.mxu0 0.0
    %485 = vmatpush1.msra.mxu0 0.0
    %486 = vmatprep.subr.mxu0 0.0
    %487 = vmatpush1.msra.mxu0 0.0
    %488 = vmatprep.subr.mxu0 0.0
    %489 = vmatpush1.msra.mxu0 0.0
    %490 = vmatprep.subr.mxu0 0.0
    %491 = vmatpush1.msra.mxu0 %v402
    %492 = vmatprep.subr.mxu0 0.0
    %493 = vmatpush2.msra.mxu0 0.0
    %494 = vmatprep.subr.mxu0 0.0
    %495 = vmatpush2.msra.mxu0 0.0
    %496 = vmatprep.subr.mxu0 0.0
    %497 = vmatpush2.msra.mxu0 0.0
    %498 = vmatprep.subr.mxu0 0.0
    %499 = vmatpush2.msra.mxu0 0.0
    %500 = vmatprep.subr.mxu0 0.0
    %501 = vmatpush2.msra.mxu0 0.0
    %502 = vmatprep.subr.mxu0 0.0
    %503 = vmatpush2.msra.mxu0 0.0
    %504 = vmatprep.subr.mxu0 0.0
    %505 = vmatpush2.msra.mxu0 0.0
    %506 = vmatprep.subr.mxu0 0.0
    %507 = vmatpush2.msra.mxu0 0.0
    %508 = vmatprep.subr.mxu0 0.0
    %509 = vmatpush2.msra.mxu0 0.0
    %510 = vmatprep.subr.mxu0 0.0
    %511 = vmatpush2.msra.mxu0 0.0
    %512 = vmatprep.subr.mxu0 0.0
    %513 = vmatpush2.msra.mxu0 0.0
    %514 = vmatprep.subr.mxu0 0.0
    %515 = vmatpush2.msra.mxu0 0.0
    %516 = vmatprep.subr.mxu0 0.0
    %517 = vmatpush2.msra.mxu0 0.0
    %518 = vmatprep.subr.mxu0 0.0
    %519 = vmatpush2.msra.mxu0 0.0
    %520 = vmatprep.subr.mxu0 0.0
    %521 = vmatpush2.msra.mxu0 0.0
    %522 = vmatprep.subr.mxu0 0.0
    %523 = vmatpush2.msra.mxu0 0.0
    %524 = vmatprep.mubr.f32.mxu0 0.0
    %525 = vmatmul.mubr.f32.gmra.mxu0 %v437
    %v526 = vpop.f32.mrf.mxu0
    %v527 = vadd.f32 0.0, %v526
    %v528 = vpop.f32.mrf.mxu0
    %529 = vmatprep.mubr.f32.mxu0 0.0
    %530 = vmatmul.mubr.f32.gmra.mxu0 %v440
    %v531 = vpop.f32.mrf.mxu0
    %v532 = vadd.f32 0.0, %v531
    %v533 = vpop.f32.mrf.mxu0
    %534 = vmatprep.mubr.f32.mxu0 0.0
    %535 = vmatmul.mubr.f32.gmra.mxu0 %v443
    %v536 = vpop.f32.mrf.mxu0
    %v537 = vadd.f32 0.0, %v536
    %v538 = vpop.f32.mrf.mxu0
    %539 = vmatprep.mubr.f32.mxu0 0.0
    %540 = vmatmul.mubr.f32.gmra.mxu0 %v446
    %v541 = vpop.f32.mrf.mxu0
    %v542 = vadd.f32 0.0, %v541
    %v543 = vpop.f32.mrf.mxu0
    %544 = vmatprep.mubr.f32.mxu0 0.0
    %545 = vmatmul.mubr.f32.gmra.mxu0 %v449
    %v546 = vpop.f32.mrf.mxu0
    %v547 = vadd.f32 0.0, %v546
    %v548 = vpop.f32.mrf.mxu0
    %549 = vmatprep.mubr.f32.mxu0 0.0
    %550 = vmatmul.mubr.f32.gmra.mxu0 %v452
    %v551 = vpop.f32.mrf.mxu0
    %v552 = vadd.f32 0.0, %v551
    %v553 = vpop.f32.mrf.mxu0
    %554 = vmatprep.mubr.f32.mxu0 0.0
    %555 = vmatmul.mubr.f32.gmra.mxu0 %v455
    %v556 = vpop.f32.mrf.mxu0
    %v557 = vadd.f32 0.0, %v556
    %v558 = vpop.f32.mrf.mxu0
    %559 = vmatprep.mubr.f32.mxu0 0.0
    %560 = vmatmul.mubr.f32.gmra.mxu0 %v458
    %v561 = vpop.f32.mrf.mxu0
    %v562 = vadd.f32 0.0, %v561
    %v563 = vpop.f32.mrf.mxu0
    %564 = vdwg.mxu0
    %567 = vrot.lane.b32.xlu0 %v537, 120
    %v568 = vpop.permute.xlu0 %567
    %569 = vrot.lane.b32.xlu0 %v542, 120
    %v570 = vpop.permute.xlu0 %569
    %v573 = vadd.f32 %v527, %v568
    %v574 = vadd.f32 %v532, %v570
    %577 = vrot.lane.b32.xlu0 %v547, 112
    %v578 = vpop.permute.xlu0 %577
    %579 = vrot.lane.b32.xlu0 %v552, 112
    %v580 = vpop.permute.xlu0 %579
    %v583 = vadd.f32 %v573, %v578
    %v584 = vadd.f32 %v574, %v580
    %587 = vrot.lane.b32.xlu0 %v557, 104
    %v588 = vpop.permute.xlu0 %587
    %589 = vrot.lane.b32.xlu0 %v562, 104
    %v590 = vpop.permute.xlu0 %589
    %v593 = vadd.f32 %v583, %v588
    %v594 = vadd.f32 %v584, %v590
    %v595 = vsel %vm43, %v402, 0.0
    %v596 = vrot.slane %v595, 4
    %v597 = vadd.f32 %v595, %v596
    %v598 = vrot.slane %v597, 2
    %v599 = vadd.f32 %v597, %v598
    %v600 = vrot.slane %v599, 1
    %v601 = vadd.f32 %v599, %v600
    %603 = vrot.lane.b32.xlu0 %v601, 120
    %v604 = vpop.permute.xlu0 %603
    %v606 = vadd.f32 %v601, %v604
    %607 = vrot.lane.b32.xlu0 %v601, 112
    %v608 = vpop.permute.xlu0 %607
    %v610 = vadd.f32 %v606, %v608
    %611 = vrot.lane.b32.xlu0 %v601, 104
    %v612 = vpop.permute.xlu0 %611
    %v614 = vadd.f32 %v610, %v612
    %v615 = vld [vmem:[%s5] sm:$0xff]
    %v616 = vld [vmem:[%s5 + $0x8] sm:$0xff]
    %v617 = vlaneseq
    %v618 = vshrl.u32 %v617, 7
    %v619 = vsub.s32 0, %v618
    %v620 = vrot.slane %v614, %v619
    %v621 = vmul.f32 %v620, %v615
    %v622 = vmul.f32 %v620, %v616
    %v623 = vsub.f32 %v593, %v621
    %v624 = vsub.f32 %v594, %v622
    %v625 = vmul.f32 %v623, %v623
    %v626 = vmul.f32 %v624, %v624
    %v627 = vsel %vm238, %v625, 0.0
    %v628 = vsel %vm238, %v626, 0.0
    %v629 = vadd.f32 %v627, %v628
    %v630 = vrot.slane %v629, 4
    %v631 = vadd.f32 %v629, %v630
    %v632 = vrot.slane %v631, 2
    %v633 = vadd.f32 %v631, %v632
    %v634 = vrot.slane %v633, 1
    %v635 = vadd.f32 %v633, %v634
    %v636 = vmax.f32 %v635, 1e-24
    %v637 = vrsqrt.pop %v636
    %v638 = vmul.f32 %v623, %v637
    %v639 = vmul.f32 %v624, %v637
    %v640 = vld [vmem:[%s6] sm:$0xff]
    %v641 = vld [vmem:[%s6 + $0x8] sm:$0xff]
    %642 = vxpose.xlu0.b32.start [1/16] %v638, 128
    %643 = vxpose.xlu0.b32.cont [2/16] %v639, 128
    %644 = vxpose.xlu0.b32.cont [3/16] 0.0, 128
    %645 = vxpose.xlu0.b32.cont [4/16] 0.0, 128
    %646 = vxpose.xlu0.b32.cont [5/16] 0.0, 128
    %647 = vxpose.xlu0.b32.cont [6/16] 0.0, 128
    %648 = vxpose.xlu0.b32.cont [7/16] 0.0, 128
    %649 = vxpose.xlu0.b32.cont [8/16] 0.0, 128
    %650 = vxpose.xlu0.b32.cont [9/16] 0.0, 128
    %651 = vxpose.xlu0.b32.cont [10/16] 0.0, 128
    %652 = vxpose.xlu0.b32.cont [11/16] 0.0, 128
    %653 = vxpose.xlu0.b32.cont [12/16] 0.0, 128
    %654 = vxpose.xlu0.b32.cont [13/16] 0.0, 128
    %655 = vxpose.xlu0.b32.cont [14/16] 0.0, 128
    %656 = vxpose.xlu0.b32.cont [15/16] 0.0, 128
    %657 = vxpose.xlu0.b32.end [16/16] 0.0, 128
    %v658 = vpop.trf.xlu0
    %v659 = vpop.trf.xlu0
    %v660 = vpop.trf.xlu0
    %v661 = vpop.trf.xlu0
    %v662 = vpop.trf.xlu0
    %v663 = vpop.trf.xlu0
    %v664 = vpop.trf.xlu0
    %v665 = vpop.trf.xlu0
    %v666 = vpop.trf.xlu0
    %v667 = vpop.trf.xlu0
    %v668 = vpop.trf.xlu0
    %v669 = vpop.trf.xlu0
    %v670 = vpop.trf.xlu0
    %v671 = vpop.trf.xlu0
    %v672 = vpop.trf.xlu0
    %v673 = vpop.trf.xlu0
    %v675 = vsel %vm398, %v658, 0
    %677 = vmatprep.subr.mxu0 0.0
    %678 = vmatpush1.msra.mxu0 0.0
    %679 = vmatprep.subr.mxu0 0.0
    %680 = vmatpush1.msra.mxu0 0.0
    %681 = vmatprep.subr.mxu0 0.0
    %682 = vmatpush1.msra.mxu0 0.0
    %683 = vmatprep.subr.mxu0 0.0
    %684 = vmatpush1.msra.mxu0 0.0
    %685 = vmatprep.subr.mxu0 0.0
    %686 = vmatpush1.msra.mxu0 0.0
    %687 = vmatprep.subr.mxu0 0.0
    %688 = vmatpush1.msra.mxu0 0.0
    %689 = vmatprep.subr.mxu0 0.0
    %690 = vmatpush1.msra.mxu0 0.0
    %691 = vmatprep.subr.mxu0 0.0
    %692 = vmatpush1.msra.mxu0 0.0
    %693 = vmatprep.subr.mxu0 0.0
    %694 = vmatpush1.msra.mxu0 0.0
    %695 = vmatprep.subr.mxu0 0.0
    %696 = vmatpush1.msra.mxu0 0.0
    %697 = vmatprep.subr.mxu0 0.0
    %698 = vmatpush1.msra.mxu0 0.0
    %699 = vmatprep.subr.mxu0 0.0
    %700 = vmatpush1.msra.mxu0 0.0
    %701 = vmatprep.subr.mxu0 0.0
    %702 = vmatpush1.msra.mxu0 0.0
    %703 = vmatprep.subr.mxu0 0.0
    %704 = vmatpush1.msra.mxu0 0.0
    %705 = vmatprep.subr.mxu0 0.0
    %706 = vmatpush1.msra.mxu0 %v641
    %707 = vmatprep.subr.mxu0 0.0
    %708 = vmatpush1.msra.mxu0 %v640
    %709 = vmatprep.subr.mxu0 0.0
    %710 = vmatpush2.msra.mxu0 0.0
    %711 = vmatprep.subr.mxu0 0.0
    %712 = vmatpush2.msra.mxu0 0.0
    %713 = vmatprep.subr.mxu0 0.0
    %714 = vmatpush2.msra.mxu0 0.0
    %715 = vmatprep.subr.mxu0 0.0
    %716 = vmatpush2.msra.mxu0 0.0
    %717 = vmatprep.subr.mxu0 0.0
    %718 = vmatpush2.msra.mxu0 0.0
    %719 = vmatprep.subr.mxu0 0.0
    %720 = vmatpush2.msra.mxu0 0.0
    %721 = vmatprep.subr.mxu0 0.0
    %722 = vmatpush2.msra.mxu0 0.0
    %723 = vmatprep.subr.mxu0 0.0
    %724 = vmatpush2.msra.mxu0 0.0
    %725 = vmatprep.subr.mxu0 0.0
    %726 = vmatpush2.msra.mxu0 0.0
    %727 = vmatprep.subr.mxu0 0.0
    %728 = vmatpush2.msra.mxu0 0.0
    %729 = vmatprep.subr.mxu0 0.0
    %730 = vmatpush2.msra.mxu0 0.0
    %731 = vmatprep.subr.mxu0 0.0
    %732 = vmatpush2.msra.mxu0 0.0
    %733 = vmatprep.subr.mxu0 0.0
    %734 = vmatpush2.msra.mxu0 0.0
    %735 = vmatprep.subr.mxu0 0.0
    %736 = vmatpush2.msra.mxu0 0.0
    %737 = vmatprep.subr.mxu0 0.0
    %738 = vmatpush2.msra.mxu0 0.0
    %739 = vmatprep.subr.mxu0 0.0
    %740 = vmatpush2.msra.mxu0 0.0
    %741 = vmatprep.mubr.f32.mxu0 0.0
    %742 = vmatmul.mubr.f32.gmra.mxu0 %v675
    %v743 = vpop.f32.mrf.mxu0
    %v744 = vadd.f32 0.0, %v743
    %v745 = vpop.f32.mrf.mxu0
    %746 = vdwg.mxu0
    %v747 = vld [vmem:[%s7] sm:$0x1]
    %v748 = vadd.f32 %v747, %v744
    %v751 = vunpack.c.l.s4 1966171168
    %v752 = vunpack.c.0.s8 %v751
    %v753 = vlaneseq
    %v754 = vshrl.u32 %v753, 7
    %v755 = vsub.s32 %v752, %v754
    %v756 = vrot.slane %v744, %v755
    %v757 = vcombine.high %v756, %v756
    %v759 = vunpack.c.l.s4 1966171168
    %v760 = vunpack.c.0.s8 %v759
    %v761 = vlaneseq
    %v762 = vshrl.u32 %v761, 7
    %v763 = vsub.s32 %v760, %v762
    %v764 = vrot.slane %v756, %v763
    %v766 = vunpack.c.l.s4 1966171168
    %v767 = vunpack.c.0.s8 %v766
    %v768 = vlaneseq
    %v769 = vshrl.u32 %v768, 7
    %v770 = vsub.s32 %v767, %v769
    %v771 = vrot.slane %v757, %v770
    %772 = vrot.lane.b32.xlu0 %v771, 112
    %v773 = vpop.permute.xlu0 %772
    %v775 = vadd.f32 %v748, %v773
    %v776 = vcombine.high %v764, %v764
    %777 = vrot.lane.b32.xlu0 %v776, 96
    %v778 = vpop.permute.xlu0 %777
    %v780 = vadd.f32 %v775, %v778
    %v781 = vcombine.high %v771, %v771
    %782 = vrot.lane.b32.xlu0 %v781, 80
    %v783 = vpop.permute.xlu0 %782
    %v785 = vadd.f32 %v780, %v783
    %v786 = vcombine.high %v744, %v744
    %v788 = vunpack.c.l.s4 1966171168
    %v789 = vunpack.c.0.s8 %v788
    %v790 = vlaneseq
    %v791 = vshrl.u32 %v790, 7
    %v792 = vsub.s32 %v789, %v791
    %v793 = vrot.slane %v786, %v792
    %v795 = vunpack.c.l.s4 1966171168
    %v796 = vunpack.c.0.s8 %v795
    %v797 = vlaneseq
    %v798 = vshrl.u32 %v797, 7
    %v799 = vsub.s32 %v796, %v798
    %v800 = vrot.slane %v793, %v799
    %801 = vrot.lane.b32.xlu0 %v800, 64
    %v802 = vpop.permute.xlu0 %801
    %v804 = vadd.f32 %v785, %v802
    %v805 = vcombine.high %v793, %v793
    %v807 = vunpack.c.l.s4 1966171168
    %v808 = vunpack.c.0.s8 %v807
    %v809 = vlaneseq
    %v810 = vshrl.u32 %v809, 7
    %v811 = vsub.s32 %v808, %v810
    %v812 = vrot.slane %v805, %v811
    %813 = vrot.lane.b32.xlu0 %v812, 48
    %v814 = vpop.permute.xlu0 %813
    %v816 = vadd.f32 %v804, %v814
    %v817 = vcombine.high %v800, %v800
    %818 = vrot.lane.b32.xlu0 %v817, 32
    %v819 = vpop.permute.xlu0 %818
    %v821 = vadd.f32 %v816, %v819
    %v822 = vcombine.high %v812, %v812
    %823 = vrot.lane.b32.xlu0 %v822, 16
    %v824 = vpop.permute.xlu0 %823
    %v826 = vadd.f32 %v821, %v824
    %827 = vxpose.xlu0.b32.start [1/16] %v122, 128
    %828 = vxpose.xlu0.b32.cont [2/16] 0.0, 128
    %829 = vxpose.xlu0.b32.cont [3/16] 0.0, 128
    %830 = vxpose.xlu0.b32.cont [4/16] 0.0, 128
    %831 = vxpose.xlu0.b32.cont [5/16] 0.0, 128
    %832 = vxpose.xlu0.b32.cont [6/16] 0.0, 128
    %833 = vxpose.xlu0.b32.cont [7/16] 0.0, 128
    %834 = vxpose.xlu0.b32.cont [8/16] 0.0, 128
    %835 = vxpose.xlu0.b32.cont [9/16] 0.0, 128
    %836 = vxpose.xlu0.b32.cont [10/16] 0.0, 128
    %837 = vxpose.xlu0.b32.cont [11/16] 0.0, 128
    %838 = vxpose.xlu0.b32.cont [12/16] 0.0, 128
    %839 = vxpose.xlu0.b32.cont [13/16] 0.0, 128
    %840 = vxpose.xlu0.b32.cont [14/16] 0.0, 128
    %841 = vxpose.xlu0.b32.cont [15/16] 0.0, 128
    %842 = vxpose.xlu0.b32.end [16/16] 0.0, 128
    %v843 = vpop.trf.xlu0
    %v844 = vpop.trf.xlu0
    %v845 = vpop.trf.xlu0
    %v846 = vpop.trf.xlu0
    %v847 = vpop.trf.xlu0
    %v848 = vpop.trf.xlu0
    %v849 = vpop.trf.xlu0
    %v850 = vpop.trf.xlu0
    %v851 = vpop.trf.xlu0
    %v852 = vpop.trf.xlu0
    %v853 = vpop.trf.xlu0
    %v854 = vpop.trf.xlu0
    %v855 = vpop.trf.xlu0
    %v856 = vpop.trf.xlu0
    %v857 = vpop.trf.xlu0
    %v858 = vpop.trf.xlu0
    %v860 = vsel %vm238, %v843, 0
    %v863 = vsel %vm238, %v844, 0
    %v866 = vsel %vm238, %v845, 0
    %v869 = vsel %vm238, %v846, 0
    %v872 = vsel %vm238, %v847, 0
    %v875 = vsel %vm238, %v848, 0
    %v878 = vsel %vm238, %v849, 0
    %v881 = vsel %vm238, %v850, 0
    %883 = vmatprep.subr.mxu0 0.0
    %884 = vmatpush1.msra.mxu0 0.0
    %885 = vmatprep.subr.mxu0 0.0
    %886 = vmatpush1.msra.mxu0 0.0
    %887 = vmatprep.subr.mxu0 0.0
    %888 = vmatpush1.msra.mxu0 0.0
    %889 = vmatprep.subr.mxu0 0.0
    %890 = vmatpush1.msra.mxu0 0.0
    %891 = vmatprep.subr.mxu0 0.0
    %892 = vmatpush1.msra.mxu0 0.0
    %893 = vmatprep.subr.mxu0 0.0
    %894 = vmatpush1.msra.mxu0 0.0
    %895 = vmatprep.subr.mxu0 0.0
    %896 = vmatpush1.msra.mxu0 0.0
    %897 = vmatprep.subr.mxu0 0.0
    %898 = vmatpush1.msra.mxu0 0.0
    %899 = vmatprep.subr.mxu0 0.0
    %900 = vmatpush1.msra.mxu0 0.0
    %901 = vmatprep.subr.mxu0 0.0
    %902 = vmatpush1.msra.mxu0 0.0
    %903 = vmatprep.subr.mxu0 0.0
    %904 = vmatpush1.msra.mxu0 0.0
    %905 = vmatprep.subr.mxu0 0.0
    %906 = vmatpush1.msra.mxu0 0.0
    %907 = vmatprep.subr.mxu0 0.0
    %908 = vmatpush1.msra.mxu0 0.0
    %909 = vmatprep.subr.mxu0 0.0
    %910 = vmatpush1.msra.mxu0 0.0
    %911 = vmatprep.subr.mxu0 0.0
    %912 = vmatpush1.msra.mxu0 0.0
    %913 = vmatprep.subr.mxu0 0.0
    %914 = vmatpush1.msra.mxu0 %v403
    %915 = vmatprep.subr.mxu0 0.0
    %916 = vmatpush2.msra.mxu0 0.0
    %917 = vmatprep.subr.mxu0 0.0
    %918 = vmatpush2.msra.mxu0 0.0
    %919 = vmatprep.subr.mxu0 0.0
    %920 = vmatpush2.msra.mxu0 0.0
    %921 = vmatprep.subr.mxu0 0.0
    %922 = vmatpush2.msra.mxu0 0.0
    %923 = vmatprep.subr.mxu0 0.0
    %924 = vmatpush2.msra.mxu0 0.0
    %925 = vmatprep.subr.mxu0 0.0
    %926 = vmatpush2.msra.mxu0 0.0
    %927 = vmatprep.subr.mxu0 0.0
    %928 = vmatpush2.msra.mxu0 0.0
    %929 = vmatprep.subr.mxu0 0.0
    %930 = vmatpush2.msra.mxu0 0.0
    %931 = vmatprep.subr.mxu0 0.0
    %932 = vmatpush2.msra.mxu0 0.0
    %933 = vmatprep.subr.mxu0 0.0
    %934 = vmatpush2.msra.mxu0 0.0
    %935 = vmatprep.subr.mxu0 0.0
    %936 = vmatpush2.msra.mxu0 0.0
    %937 = vmatprep.subr.mxu0 0.0
    %938 = vmatpush2.msra.mxu0 0.0
    %939 = vmatprep.subr.mxu0 0.0
    %940 = vmatpush2.msra.mxu0 0.0
    %941 = vmatprep.subr.mxu0 0.0
    %942 = vmatpush2.msra.mxu0 0.0
    %943 = vmatprep.subr.mxu0 0.0
    %944 = vmatpush2.msra.mxu0 0.0
    %945 = vmatprep.subr.mxu0 0.0
    %946 = vmatpush2.msra.mxu0 0.0
    %947 = vmatprep.mubr.f32.mxu0 0.0
    %948 = vmatmul.mubr.f32.gmra.mxu0 %v860
    %v949 = vpop.f32.mrf.mxu0
    %v950 = vadd.f32 0.0, %v949
    %v951 = vpop.f32.mrf.mxu0
    %952 = vmatprep.mubr.f32.mxu0 0.0
    %953 = vmatmul.mubr.f32.gmra.mxu0 %v863
    %v954 = vpop.f32.mrf.mxu0
    %v955 = vadd.f32 0.0, %v954
    %v956 = vpop.f32.mrf.mxu0
    %957 = vmatprep.mubr.f32.mxu0 0.0
    %958 = vmatmul.mubr.f32.gmra.mxu0 %v866
    %v959 = vpop.f32.mrf.mxu0
    %v960 = vadd.f32 0.0, %v959
    %v961 = vpop.f32.mrf.mxu0
    %962 = vmatprep.mubr.f32.mxu0 0.0
    %963 = vmatmul.mubr.f32.gmra.mxu0 %v869
    %v964 = vpop.f32.mrf.mxu0
    %v965 = vadd.f32 0.0, %v964
    %v966 = vpop.f32.mrf.mxu0
    %967 = vmatprep.mubr.f32.mxu0 0.0
    %968 = vmatmul.mubr.f32.gmra.mxu0 %v872
    %v969 = vpop.f32.mrf.mxu0
    %v970 = vadd.f32 0.0, %v969
    %v971 = vpop.f32.mrf.mxu0
    %972 = vmatprep.mubr.f32.mxu0 0.0
    %973 = vmatmul.mubr.f32.gmra.mxu0 %v875
    %v974 = vpop.f32.mrf.mxu0
    %v975 = vadd.f32 0.0, %v974
    %v976 = vpop.f32.mrf.mxu0
    %977 = vmatprep.mubr.f32.mxu0 0.0
    %978 = vmatmul.mubr.f32.gmra.mxu0 %v878
    %v979 = vpop.f32.mrf.mxu0
    %v980 = vadd.f32 0.0, %v979
    %v981 = vpop.f32.mrf.mxu0
    %982 = vmatprep.mubr.f32.mxu0 0.0
    %983 = vmatmul.mubr.f32.gmra.mxu0 %v881
    %v984 = vpop.f32.mrf.mxu0
    %v985 = vadd.f32 0.0, %v984
    %v986 = vpop.f32.mrf.mxu0
    %987 = vdwg.mxu0
    %990 = vrot.lane.b32.xlu0 %v960, 120
    %v991 = vpop.permute.xlu0 %990
    %992 = vrot.lane.b32.xlu0 %v965, 120
    %v993 = vpop.permute.xlu0 %992
    %v996 = vadd.f32 %v950, %v991
    %v997 = vadd.f32 %v955, %v993
    %1000 = vrot.lane.b32.xlu0 %v970, 112
    %v1001 = vpop.permute.xlu0 %1000
    %1002 = vrot.lane.b32.xlu0 %v975, 112
    %v1003 = vpop.permute.xlu0 %1002
    %v1006 = vadd.f32 %v996, %v1001
    %v1007 = vadd.f32 %v997, %v1003
    %1010 = vrot.lane.b32.xlu0 %v980, 104
    %v1011 = vpop.permute.xlu0 %1010
    %1012 = vrot.lane.b32.xlu0 %v985, 104
    %v1013 = vpop.permute.xlu0 %1012
    %v1016 = vadd.f32 %v1006, %v1011
    %v1017 = vadd.f32 %v1007, %v1013
    %v1018 = vsel %vm43, %v403, 0.0
    %v1019 = vrot.slane %v1018, 4
    %v1020 = vadd.f32 %v1018, %v1019
    %v1021 = vrot.slane %v1020, 2
    %v1022 = vadd.f32 %v1020, %v1021
    %v1023 = vrot.slane %v1022, 1
    %v1024 = vadd.f32 %v1022, %v1023
    %1026 = vrot.lane.b32.xlu0 %v1024, 120
    %v1027 = vpop.permute.xlu0 %1026
    %v1029 = vadd.f32 %v1024, %v1027
    %1030 = vrot.lane.b32.xlu0 %v1024, 112
    %v1031 = vpop.permute.xlu0 %1030
    %v1033 = vadd.f32 %v1029, %v1031
    %1034 = vrot.lane.b32.xlu0 %v1024, 104
    %v1035 = vpop.permute.xlu0 %1034
    %v1037 = vadd.f32 %v1033, %v1035
    %v1038 = vlaneseq
    %v1039 = vshrl.u32 %v1038, 7
    %v1040 = vsub.s32 0, %v1039
    %v1041 = vrot.slane %v1037, %v1040
    %v1042 = vmul.f32 %v1041, %v615
    %v1043 = vmul.f32 %v1041, %v616
    %v1044 = vsub.f32 %v1016, %v1042
    %v1045 = vsub.f32 %v1017, %v1043
    %v1046 = vmul.f32 %v1044, %v1044
    %v1047 = vmul.f32 %v1045, %v1045
    %v1048 = vsel %vm238, %v1046, 0.0
    %v1049 = vsel %vm238, %v1047, 0.0
    %v1050 = vadd.f32 %v1048, %v1049
    %v1051 = vrot.slane %v1050, 4
    %v1052 = vadd.f32 %v1050, %v1051
    %v1053 = vrot.slane %v1052, 2
    %v1054 = vadd.f32 %v1052, %v1053
    %v1055 = vrot.slane %v1054, 1
    %v1056 = vadd.f32 %v1054, %v1055
    %v1057 = vmax.f32 %v1056, 1e-24
    %v1058 = vrsqrt.pop %v1057
    %v1059 = vmul.f32 %v1044, %v1058
    %v1060 = vmul.f32 %v1045, %v1058
    %1061 = vxpose.xlu0.b32.start [1/16] %v1059, 128
    %1062 = vxpose.xlu0.b32.cont [2/16] %v1060, 128
    %1063 = vxpose.xlu0.b32.cont [3/16] 0.0, 128
    %1064 = vxpose.xlu0.b32.cont [4/16] 0.0, 128
    %1065 = vxpose.xlu0.b32.cont [5/16] 0.0, 128
    %1066 = vxpose.xlu0.b32.cont [6/16] 0.0, 128
    %1067 = vxpose.xlu0.b32.cont [7/16] 0.0, 128
    %1068 = vxpose.xlu0.b32.cont [8/16] 0.0, 128
    %1069 = vxpose.xlu0.b32.cont [9/16] 0.0, 128
    %1070 = vxpose.xlu0.b32.cont [10/16] 0.0, 128
    %1071 = vxpose.xlu0.b32.cont [11/16] 0.0, 128
    %1072 = vxpose.xlu0.b32.cont [12/16] 0.0, 128
    %1073 = vxpose.xlu0.b32.cont [13/16] 0.0, 128
    %1074 = vxpose.xlu0.b32.cont [14/16] 0.0, 128
    %1075 = vxpose.xlu0.b32.cont [15/16] 0.0, 128
    %1076 = vxpose.xlu0.b32.end [16/16] 0.0, 128
    %v1077 = vpop.trf.xlu0
    %v1078 = vpop.trf.xlu0
    %v1079 = vpop.trf.xlu0
    %v1080 = vpop.trf.xlu0
    %v1081 = vpop.trf.xlu0
    %v1082 = vpop.trf.xlu0
    %v1083 = vpop.trf.xlu0
    %v1084 = vpop.trf.xlu0
    %v1085 = vpop.trf.xlu0
    %v1086 = vpop.trf.xlu0
    %v1087 = vpop.trf.xlu0
    %v1088 = vpop.trf.xlu0
    %v1089 = vpop.trf.xlu0
    %v1090 = vpop.trf.xlu0
    %v1091 = vpop.trf.xlu0
    %v1092 = vpop.trf.xlu0
    %v1094 = vsel %vm398, %v1077, 0
    %1096 = vmatprep.subr.mxu0 0.0
    %1097 = vmatpush1.msra.mxu0 0.0
    %1098 = vmatprep.subr.mxu0 0.0
    %1099 = vmatpush1.msra.mxu0 0.0
    %1100 = vmatprep.subr.mxu0 0.0
    %1101 = vmatpush1.msra.mxu0 0.0
    %1102 = vmatprep.subr.mxu0 0.0
    %1103 = vmatpush1.msra.mxu0 0.0
    %1104 = vmatprep.subr.mxu0 0.0
    %1105 = vmatpush1.msra.mxu0 0.0
    %1106 = vmatprep.subr.mxu0 0.0
    %1107 = vmatpush1.msra.mxu0 0.0
    %1108 = vmatprep.subr.mxu0 0.0
    %1109 = vmatpush1.msra.mxu0 0.0
    %1110 = vmatprep.subr.mxu0 0.0
    %1111 = vmatpush1.msra.mxu0 0.0
    %1112 = vmatprep.subr.mxu0 0.0
    %1113 = vmatpush1.msra.mxu0 0.0
    %1114 = vmatprep.subr.mxu0 0.0
    %1115 = vmatpush1.msra.mxu0 0.0
    %1116 = vmatprep.subr.mxu0 0.0
    %1117 = vmatpush1.msra.mxu0 0.0
    %1118 = vmatprep.subr.mxu0 0.0
    %1119 = vmatpush1.msra.mxu0 0.0
    %1120 = vmatprep.subr.mxu0 0.0
    %1121 = vmatpush1.msra.mxu0 0.0
    %1122 = vmatprep.subr.mxu0 0.0
    %1123 = vmatpush1.msra.mxu0 0.0
    %1124 = vmatprep.subr.mxu0 0.0
    %1125 = vmatpush1.msra.mxu0 %v641
    %1126 = vmatprep.subr.mxu0 0.0
    %1127 = vmatpush1.msra.mxu0 %v640
    %1128 = vmatprep.subr.mxu0 0.0
    %1129 = vmatpush2.msra.mxu0 0.0
    %1130 = vmatprep.subr.mxu0 0.0
    %1131 = vmatpush2.msra.mxu0 0.0
    %1132 = vmatprep.subr.mxu0 0.0
    %1133 = vmatpush2.msra.mxu0 0.0
    %1134 = vmatprep.subr.mxu0 0.0
    %1135 = vmatpush2.msra.mxu0 0.0
    %1136 = vmatprep.subr.mxu0 0.0
    %1137 = vmatpush2.msra.mxu0 0.0
    %1138 = vmatprep.subr.mxu0 0.0
    %1139 = vmatpush2.msra.mxu0 0.0
    %1140 = vmatprep.subr.mxu0 0.0
    %1141 = vmatpush2.msra.mxu0 0.0
    %1142 = vmatprep.subr.mxu0 0.0
    %1143 = vmatpush2.msra.mxu0 0.0
    %1144 = vmatprep.subr.mxu0 0.0
    %1145 = vmatpush2.msra.mxu0 0.0
    %1146 = vmatprep.subr.mxu0 0.0
    %1147 = vmatpush2.msra.mxu0 0.0
    %1148 = vmatprep.subr.mxu0 0.0
    %1149 = vmatpush2.msra.mxu0 0.0
    %1150 = vmatprep.subr.mxu0 0.0
    %1151 = vmatpush2.msra.mxu0 0.0
    %1152 = vmatprep.subr.mxu0 0.0
    %1153 = vmatpush2.msra.mxu0 0.0
    %1154 = vmatprep.subr.mxu0 0.0
    %1155 = vmatpush2.msra.mxu0 0.0
    %1156 = vmatprep.subr.mxu0 0.0
    %1157 = vmatpush2.msra.mxu0 0.0
    %1158 = vmatprep.subr.mxu0 0.0
    %1159 = vmatpush2.msra.mxu0 0.0
    %1160 = vmatprep.mubr.f32.mxu0 0.0
    %1161 = vmatmul.mubr.f32.gmra.mxu0 %v1094
    %v1162 = vpop.f32.mrf.mxu0
    %v1163 = vadd.f32 0.0, %v1162
    %v1164 = vpop.f32.mrf.mxu0
    %1165 = vdwg.mxu0
    %v1166 = vadd.f32 %v747, %v1163
    %v1169 = vunpack.c.l.s4 1966171168
    %v1170 = vunpack.c.0.s8 %v1169
    %v1171 = vlaneseq
    %v1172 = vshrl.u32 %v1171, 7
    %v1173 = vsub.s32 %v1170, %v1172
    %v1174 = vrot.slane %v1163, %v1173
    %v1175 = vcombine.high %v1174, %v1174
    %v1177 = vunpack.c.l.s4 1966171168
    %v1178 = vunpack.c.0.s8 %v1177
    %v1179 = vlaneseq
    %v1180 = vshrl.u32 %v1179, 7
    %v1181 = vsub.s32 %v1178, %v1180
    %v1182 = vrot.slane %v1174, %v1181
    %v1184 = vunpack.c.l.s4 1966171168
    %v1185 = vunpack.c.0.s8 %v1184
    %v1186 = vlaneseq
    %v1187 = vshrl.u32 %v1186, 7
    %v1188 = vsub.s32 %v1185, %v1187
    %v1189 = vrot.slane %v1175, %v1188
    %1190 = vrot.lane.b32.xlu0 %v1189, 112
    %v1191 = vpop.permute.xlu0 %1190
    %v1193 = vadd.f32 %v1166, %v1191
    %v1194 = vcombine.high %v1182, %v1182
    %1195 = vrot.lane.b32.xlu0 %v1194, 96
    %v1196 = vpop.permute.xlu0 %1195
    %v1198 = vadd.f32 %v1193, %v1196
    %v1199 = vcombine.high %v1189, %v1189
    %1200 = vrot.lane.b32.xlu0 %v1199, 80
    %v1201 = vpop.permute.xlu0 %1200
    %v1203 = vadd.f32 %v1198, %v1201
    %v1204 = vcombine.high %v1163, %v1163
    %v1206 = vunpack.c.l.s4 1966171168
    %v1207 = vunpack.c.0.s8 %v1206
    %v1208 = vlaneseq
    %v1209 = vshrl.u32 %v1208, 7
    %v1210 = vsub.s32 %v1207, %v1209
    %v1211 = vrot.slane %v1204, %v1210
    %v1213 = vunpack.c.l.s4 1966171168
    %v1214 = vunpack.c.0.s8 %v1213
    %v1215 = vlaneseq
    %v1216 = vshrl.u32 %v1215, 7
    %v1217 = vsub.s32 %v1214, %v1216
    %v1218 = vrot.slane %v1211, %v1217
    %1219 = vrot.lane.b32.xlu0 %v1218, 64
    %v1220 = vpop.permute.xlu0 %1219
    %v1222 = vadd.f32 %v1203, %v1220
    %v1223 = vcombine.high %v1211, %v1211
    %v1225 = vunpack.c.l.s4 1966171168
    %v1226 = vunpack.c.0.s8 %v1225
    %v1227 = vlaneseq
    %v1228 = vshrl.u32 %v1227, 7
    %v1229 = vsub.s32 %v1226, %v1228
    %v1230 = vrot.slane %v1223, %v1229
    %1231 = vrot.lane.b32.xlu0 %v1230, 48
    %v1232 = vpop.permute.xlu0 %1231
    %v1234 = vadd.f32 %v1222, %v1232
    %v1235 = vcombine.high %v1218, %v1218
    %1236 = vrot.lane.b32.xlu0 %v1235, 32
    %v1237 = vpop.permute.xlu0 %1236
    %v1239 = vadd.f32 %v1234, %v1237
    %v1240 = vcombine.high %v1230, %v1230
    %1241 = vrot.lane.b32.xlu0 %v1240, 16
    %v1242 = vpop.permute.xlu0 %1241
    %v1244 = vadd.f32 %v1239, %v1242
    %v1246 = vlaneseq
    %v1247 = vshrl.u32 %v1246, 7
    %v1248 = vsub.s32 0, %v1247
    %v1249 = vrot.slane %v1244, %v1248
    %vm1251 = vcmask 1040384
    %v1252 = vsel %vm1251, %v826, %v1249
    %vm1253 = vcmask 123904
    %1254 = vst.msk [vmem:[#allocation2] sm:$0x3] %vm1253, %v1252
    // Predicated region
    $region34: #{tpu_custom_call.1} parent=1 // pred_check
      _
    $region35: #{tpu_custom_call.1} parent=1 // pred_check_branch
      %1256 = sbr.rel (0) target = $region37
    $region36: #{tpu_custom_call.1} parent=1 // pred_region
      %s1258 = ssub.s32 32, 32
      %1259 = vsyncadd [#allocation3], %s1258
      %s1261 = sshll.u32 [#allocation2], 4
      %s1262 = int_to_ptr.vmem [resolvable:$true] %s1261
      %1264 = dma.vmem_to_hbm [thread:$0]  %s1262, 32, %s8, [#allocation3]
    $region37: #{tpu_custom_call.1} parent=1 // pred_fallthru
      _
    // Predicated region
    $region38: #{tpu_custom_call.1} parent=1 // pred_check
      _
    $region39: #{tpu_custom_call.1} parent=1 // pred_check_branch
      %1266 = sbr.rel (0) target = $region41
    $region40: #{tpu_custom_call.1} parent=1 // pred_region
      %1267 = dma.done [#allocation3], 32
    $region41: #{tpu_custom_call.1} parent=1 // pred_fallthru
      _
    %1268 = vsyncpa [#allocation3], 1

</llo_original>
